<compile_context>
chip_gen: v5e
topology: v5e:2x2
jax: 0.10.0
libtpu: 0.0.40
codegen_flags: <defaults>
</compile_context>

<pallas_src>
import numpy as np
import jax
import jax.numpy as jnp
from jax.experimental import pallas as pl
from jax.experimental.pallas import tpu as pltpu

# ---- problem sizes (small, consistent with the module's forward) ----
N, CIN, H, W = 2, 4, 16, 16      # input  (NCHW)
CMID = 8                         # backbone feature channels
NCLS = 3                         # classifier output classes
STRIDE = 2                       # backbone output stride
HO, WO = H // STRIDE, W // STRIDE
EPS = 1e-5
NUM_DOMAINS = 2                  # DSBN: one BN parameter set per domain


def _bilinear_matrix(in_size: int, out_size: int) -> np.ndarray:
    """1-D interpolation matrix matching F.interpolate(mode='bilinear',
    align_corners=False) exactly (half-pixel rule, edge clamp). Rows sum to 1."""
    m = np.zeros((out_size, in_size), dtype=np.float32)
    scale = in_size / out_size
    for i in range(out_size):
        src = max((i + 0.5) * scale - 0.5, 0.0)
        i0 = min(int(np.floor(src)), in_size - 1)
        i1 = min(i0 + 1, in_size - 1)
        l1 = src - i0
        m[i, i0] += 1.0 - l1
        m[i, i1] += l1
    return m


def _fused_kernel(pT_ref, wconvT_ref, shift_ref, wclsT_ref, bcls_ref,
                  ah_ref, bwT_ref, out_ref):
    # Backbone conv3x3/s2 as a channel-major im2col matmul so the collapsed
    # batch*space dim (N*Ho*Wo = 128) sits on lanes.  DSBN scale is pre-folded
    # into the weight.  bf16 operands, f32 accumulation.
    h = jnp.dot(wconvT_ref[...], pT_ref[...],
                preferred_element_type=jnp.float32)            # (Cmid, N*Ho*Wo)
    h = jnp.maximum(h + shift_ref[...], 0.0)                   # DSBN shift + ReLU
    h = h.astype(wclsT_ref.dtype)                              # bf16 for classifier

    a_h = ah_ref[...]         # (H, Ho)     f32, rows sum to 1
    bw_t = bwT_ref[...]       # (Wo, W)     f32 (B_w transposed)
    wcls_t = wclsT_ref[...]   # (NCLS, Cmid) bf16
    bcls = bcls_ref[...]      # (NCLS, 1)   f32

    # Classifier (1x1 conv) + exact separable bilinear upsample
    # (align_corners=False), accumulated straight into the NCHW output.
    for n in range(N):
        acc = [jnp.zeros((H, W), jnp.float32) for _ in range(NCLS)]
        for i in range(HO):                       # one output-stride row block
            col0 = (n * HO + i) * WO
            h_blk = h[:, col0:col0 + WO]                               # (Cmid, Wo)
            lg = jnp.dot(wcls_t, h_blk,
                         preferred_element_type=jnp.float32) + bcls    # (NCLS, Wo)
            rows = jnp.dot(lg, bw_t,
                           preferred_element_type=jnp.float32)         # (NCLS, W)
            a_col = a_h[:, i:i + 1]                                    # (H, 1)
            for c in range(NCLS):
                acc[c] = acc[c] + a_col * rows[c:c + 1, :]             # (H, W)
        for c in range(NCLS):
            out_ref[n, c, :, :] = acc[c]


def deeplabv3_dsbn_forward(x_nchw, domain, params):
    n, cin, h, w = x_nchw.shape
    ho, wo = h // STRIDE, w // STRIDE

    # ---- glue: NCHW -> NHWC, im2col for the 3x3/stride-2/pad-1 conv ----
    x_nhwc = jnp.transpose(x_nchw, (0, 2, 3, 1))
    x_pad = jnp.pad(x_nhwc, ((0, 0), (1, 1), (1, 1), (0, 0)))
    taps = []
    for ky in range(3):
        for kx in range(3):
            taps.append(
                x_pad[:, ky:ky + STRIDE * ho:STRIDE, kx:kx + STRIDE * wo:STRIDE, :])
    patches = jnp.concatenate(taps, axis=-1).reshape(n * ho * wo, 9 * cin)
    # TODO(synk): at real DeepLab sizes, slice the 9 taps inside the kernel from
    # a resident padded NHWC tile instead of materializing a 9x im2col copy in HBM.

    # ---- DSBN (eval) folded: scale into the conv weight, shift kept ----
    scale_all = params['gamma'] / jnp.sqrt(params['var'] + EPS)      # (D, Cmid)
    shift_all = params['beta'] - params['mean'] * scale_all          # (D, Cmid)
    scale = scale_all[domain]                                        # (Cmid,)
    shift_col = shift_all[domain].reshape(CMID, 1)                   # (Cmid, 1)
    wconv_folded = params['wconv'] * scale[None, :]                  # (9Cin, Cmid)

    # ---- exact bilinear (align_corners=False) 1-D matrices (no kron) ----
    a_h = jnp.asarray(_bilinear_matrix(ho, h))       # (H, Ho)
    bw_t = jnp.asarray(_bilinear_matrix(wo, w)).T    # (Wo, W)

    # ---- bf16 matmul operands (f32 accumulation in-kernel) ----
    patches_t = patches.T.astype(jnp.bfloat16)            # (9Cin, N*Ho*Wo)
    wconv_t = wconv_folded.T.astype(jnp.bfloat16)          # (Cmid, 9Cin)
    wcls_t = params['wcls'].T.astype(jnp.bfloat16)         # (NCLS, Cmid)
    bcls_col = params['bcls'].reshape(NCLS, 1)             # (NCLS, 1)

    operands = (patches_t, wconv_t, shift_col, wcls_t, bcls_col, a_h, bw_t)

    m = n * ho * wo
    flops = int(2 * CMID * 9 * cin * m            # backbone conv
                + 2 * NCLS * CMID * wo * n * ho   # classifier
                + 2 * NCLS * wo * w * n * ho      # bilinear W pass
                + 2 * NCLS * h * w * n * ho)      # bilinear H pass (rank-1 acc)
    bytes_accessed = int(sum(int(op.size) * op.dtype.itemsize for op in operands)
                         + n * NCLS * h * w * 4)

    vmem = pltpu.MemorySpace.VMEM
    out = pl.pallas_call(
        _fused_kernel,
        out_shape=jax.ShapeDtypeStruct((n, NCLS, h, w), jnp.float32),
        in_specs=[pl.BlockSpec(memory_space=vmem) for _ in operands],
        out_specs=pl.BlockSpec(memory_space=vmem),
        cost_estimate=pl.CostEstimate(flops=flops, transcendentals=0,
                                      bytes_accessed=bytes_accessed),
    )(*operands)

    return {'out': out}


def _reference_forward(x_nchw, domain, params):
    """Pure-JAX f32 reference with the same synthesized backbone/classifier."""
    n, cin, h, w = x_nchw.shape
    ho, wo = h // STRIDE, w // STRIDE
    x_nhwc = jnp.transpose(x_nchw, (0, 2, 3, 1))
    x_pad = jnp.pad(x_nhwc, ((0, 0), (1, 1), (1, 1), (0, 0)))
    taps = []
    for ky in range(3):
        for kx in range(3):
            taps.append(
                x_pad[:, ky:ky + STRIDE * ho:STRIDE, kx:kx + STRIDE * wo:STRIDE, :])
    patches = jnp.concatenate(taps, axis=-1).reshape(n * ho * wo, 9 * cin)
    scale = params['gamma'][domain] / jnp.sqrt(params['var'][domain] + EPS)
    shift = params['beta'][domain] - params['mean'][domain] * scale
    hfeat = jnp.maximum(patches @ (params['wconv'] * scale[None, :])
                        + shift[None, :], 0.0)
    logits = hfeat @ params['wcls'] + params['bcls']
    lg = logits.reshape(n, ho, wo, NCLS)
    a_h = jnp.asarray(_bilinear_matrix(ho, h))
    b_w = jnp.asarray(_bilinear_matrix(wo, w))
    up = jnp.einsum('yi,nijc->nyjc', a_h, lg)
    up = jnp.einsum('xj,nyjc->ncyx', b_w, up)
    return up


def init_params(key):
    k = jax.random.split(key, 7)
    return {
        # conv weight already in im2col layout: rows ordered (ky, kx, cin)
        'wconv': 0.1 * jax.random.normal(k[0], (9 * CIN, CMID), jnp.float32),
        'gamma': 1.0 + 0.1 * jax.random.normal(k[1], (NUM_DOMAINS, CMID), jnp.float32),
        'beta': 0.1 * jax.random.normal(k[2], (NUM_DOMAINS, CMID), jnp.float32),
        'mean': 0.1 * jax.random.normal(k[3], (NUM_DOMAINS, CMID), jnp.float32),
        'var': jnp.abs(jax.random.normal(k[4], (NUM_DOMAINS, CMID), jnp.float32)) + 0.5,
        'wcls': 0.1 * jax.random.normal(k[5], (CMID, NCLS), jnp.float32),
        'bcls': 0.1 * jax.random.normal(k[6], (1, NCLS), jnp.float32),
    }


if __name__ == "__main__":
    key = jax.random.PRNGKey(0)
    pkey, xkey = jax.random.split(key)
    params = init_params(pkey)
    x = jax.random.normal(xkey, (N, CIN, H, W), jnp.float32)
    domain = 1  # DSBN domain selector

    result = deeplabv3_dsbn_forward(x, domain, params)
    out = jax.block_until_ready(result['out'])
    assert out.shape == (N, NCLS, H, W), out.shape
    assert bool(jnp.all(jnp.isfinite(out)))

    # Validate against a pure-JAX f32 reference (bf16 matmuls -> loose tol).
    ref = _reference_forward(x, domain, params)
    np.testing.assert_allclose(np.asarray(out), np.asarray(ref),
                               atol=5e-2, rtol=5e-2)
    print("KERNEL_OK")
</pallas_src>

<mosaic_0001>
module attributes {stable_mosaic.version = 11 : i64} {
  func.func @_fused_kernel(%arg0: memref<36x128xbf16, #tpu.memory_space<vmem>>, %arg1: memref<8x36xbf16, #tpu.memory_space<vmem>>, %arg2: memref<8x1xf32, #tpu.memory_space<vmem>>, %arg3: memref<3x8xbf16, #tpu.memory_space<vmem>>, %arg4: memref<3x1xf32, #tpu.memory_space<vmem>>, %arg5: memref<16x8xf32, #tpu.memory_space<vmem>>, %arg6: memref<8x16xf32, #tpu.memory_space<vmem>>, %arg7: memref<2x3x16x16xf32, #tpu.memory_space<vmem>>) attributes {dimension_semantics = [], scalar_prefetch = 0 : i64, scratch_operands = 0 : i64, tpu.core_type = #tpu.core_type<tc>} {
    %c0 = arith.constant 0 : index
    %c0_0 = arith.constant 0 : index
    %0 = vector.load %arg1[%c0, %c0_0] : memref<8x36xbf16, #tpu.memory_space<vmem>>, vector<8x36xbf16>
    %c0_1 = arith.constant 0 : index
    %c0_2 = arith.constant 0 : index
    %1 = vector.load %arg0[%c0_1, %c0_2] : memref<36x128xbf16, #tpu.memory_space<vmem>>, vector<36x128xbf16>
    %cst = arith.constant dense<0.000000e+00> : vector<8x128xf32>
    %2 = tpu.matmul %0, %1, %cst {dimension_numbers = #tpu.dot_dimension_numbers<[1], [0], [0], [1], [0, 0, 1, 1], [], []>} : vector<8x36xbf16>, vector<36x128xbf16>, vector<8x128xf32> -> vector<8x128xf32>
    %c0_3 = arith.constant 0 : index
    %c0_4 = arith.constant 0 : index
    %3 = vector.load %arg2[%c0_3, %c0_4] : memref<8x1xf32, #tpu.memory_space<vmem>>, vector<8x1xf32>
    %4 = vector.broadcast %3 : vector<8x1xf32> to vector<8x128xf32>
    %5 = arith.addf %2, %4 : vector<8x128xf32>
    %cst_5 = arith.constant 0.000000e+00 : f32
    %6 = vector.broadcast %cst_5 : f32 to vector<8x128xf32>
    %7 = arith.maximumf %5, %6 : vector<8x128xf32>
    %8 = arith.truncf %7 : vector<8x128xf32> to vector<8x128xbf16>
    %c0_6 = arith.constant 0 : index
    %c0_7 = arith.constant 0 : index
    %9 = vector.load %arg5[%c0_6, %c0_7] : memref<16x8xf32, #tpu.memory_space<vmem>>, vector<16x8xf32>
    %c0_8 = arith.constant 0 : index
    %c0_9 = arith.constant 0 : index
    %10 = vector.load %arg6[%c0_8, %c0_9] : memref<8x16xf32, #tpu.memory_space<vmem>>, vector<8x16xf32>
    %c0_10 = arith.constant 0 : index
    %c0_11 = arith.constant 0 : index
    %11 = vector.load %arg3[%c0_10, %c0_11] : memref<3x8xbf16, #tpu.memory_space<vmem>>, vector<3x8xbf16>
    %c0_12 = arith.constant 0 : index
    %c0_13 = arith.constant 0 : index
    %12 = vector.load %arg4[%c0_12, %c0_13] : memref<3x1xf32, #tpu.memory_space<vmem>>, vector<3x1xf32>
    %cst_14 = arith.constant 0.000000e+00 : f32
    %13 = vector.broadcast %cst_14 : f32 to vector<16x16xf32>
    %cst_15 = arith.constant 0.000000e+00 : f32
    %14 = vector.broadcast %cst_15 : f32 to vector<16x16xf32>
    %cst_16 = arith.constant 0.000000e+00 : f32
    %15 = vector.broadcast %cst_16 : f32 to vector<16x16xf32>
    %16 = vector.extract_strided_slice %8 {offsets = [0, 0], sizes = [8, 8], strides = [1, 1]} : vector<8x128xbf16> to vector<8x8xbf16>
    %cst_17 = arith.constant dense<0.000000e+00> : vector<3x8xf32>
    %17 = tpu.matmul %11, %16, %cst_17 {dimension_numbers = #tpu.dot_dimension_numbers<[1], [0], [0], [1], [0, 0, 1, 1], [], []>} : vector<3x8xbf16>, vector<8x8xbf16>, vector<3x8xf32> -> vector<3x8xf32>
    %18 = vector.broadcast %12 : vector<3x1xf32> to vector<3x8xf32>
    %19 = arith.addf %17, %18 : vector<3x8xf32>
    %cst_18 = arith.constant dense<0.000000e+00> : vector<3x16xf32>
    %20 = tpu.matmul %19, %10, %cst_18 {dimension_numbers = #tpu.dot_dimension_numbers<[1], [0], [0], [1], [0, 0, 1, 1], [], []>} : vector<3x8xf32>, vector<8x16xf32>, vector<3x16xf32> -> vector<3x16xf32>
    %21 = vector.extract_strided_slice %9 {offsets = [0, 0], sizes = [16, 1], strides = [1, 1]} : vector<16x8xf32> to vector<16x1xf32>
    %22 = vector.extract_strided_slice %20 {offsets = [0, 0], sizes = [1, 16], strides = [1, 1]} : vector<3x16xf32> to vector<1x16xf32>
    %23 = vector.broadcast %21 : vector<16x1xf32> to vector<16x16xf32>
    %24 = vector.broadcast %22 : vector<1x16xf32> to vector<16x16xf32>
    %25 = arith.mulf %23, %24 : vector<16x16xf32>
    %26 = arith.addf %13, %25 : vector<16x16xf32>
    %27 = vector.extract_strided_slice %20 {offsets = [1, 0], sizes = [1, 16], strides = [1, 1]} : vector<3x16xf32> to vector<1x16xf32>
    %28 = vector.broadcast %21 : vector<16x1xf32> to vector<16x16xf32>
    %29 = vector.broadcast %27 : vector<1x16xf32> to vector<16x16xf32>
    %30 = arith.mulf %28, %29 : vector<16x16xf32>
    %31 = arith.addf %14, %30 : vector<16x16xf32>
    %32 = vector.extract_strided_slice %20 {offsets = [2, 0], sizes = [1, 16], strides = [1, 1]} : vector<3x16xf32> to vector<1x16xf32>
    %33 = vector.broadcast %21 : vector<16x1xf32> to vector<16x16xf32>
    %34 = vector.broadcast %32 : vector<1x16xf32> to vector<16x16xf32>
    %35 = arith.mulf %33, %34 : vector<16x16xf32>
    %36 = arith.addf %15, %35 : vector<16x16xf32>
    %37 = vector.extract_strided_slice %8 {offsets = [0, 8], sizes = [8, 8], strides = [1, 1]} : vector<8x128xbf16> to vector<8x8xbf16>
    %cst_19 = arith.constant dense<0.000000e+00> : vector<3x8xf32>
    %38 = tpu.matmul %11, %37, %cst_19 {dimension_numbers = #tpu.dot_dimension_numbers<[1], [0], [0], [1], [0, 0, 1, 1], [], []>} : vector<3x8xbf16>, vector<8x8xbf16>, vector<3x8xf32> -> vector<3x8xf32>
    %39 = vector.broadcast %12 : vector<3x1xf32> to vector<3x8xf32>
    %40 = arith.addf %38, %39 : vector<3x8xf32>
    %cst_20 = arith.constant dense<0.000000e+00> : vector<3x16xf32>
    %41 = tpu.matmul %40, %10, %cst_20 {dimension_numbers = #tpu.dot_dimension_numbers<[1], [0], [0], [1], [0, 0, 1, 1], [], []>} : vector<3x8xf32>, vector<8x16xf32>, vector<3x16xf32> -> vector<3x16xf32>
    %42 = vector.extract_strided_slice %9 {offsets = [0, 1], sizes = [16, 1], strides = [1, 1]} : vector<16x8xf32> to vector<16x1xf32>
    %43 = vector.extract_strided_slice %41 {offsets = [0, 0], sizes = [1, 16], strides = [1, 1]} : vector<3x16xf32> to vector<1x16xf32>
    %44 = vector.broadcast %42 : vector<16x1xf32> to vector<16x16xf32>
    %45 = vector.broadcast %43 : vector<1x16xf32> to vector<16x16xf32>
    %46 = arith.mulf %44, %45 : vector<16x16xf32>
    %47 = arith.addf %26, %46 : vector<16x16xf32>
    %48 = vector.extract_strided_slice %41 {offsets = [1, 0], sizes = [1, 16], strides = [1, 1]} : vector<3x16xf32> to vector<1x16xf32>
    %49 = vector.broadcast %42 : vector<16x1xf32> to vector<16x16xf32>
    %50 = vector.broadcast %48 : vector<1x16xf32> to vector<16x16xf32>
    %51 = arith.mulf %49, %50 : vector<16x16xf32>
    %52 = arith.addf %31, %51 : vector<16x16xf32>
    %53 = vector.extract_strided_slice %41 {offsets = [2, 0], sizes = [1, 16], strides = [1, 1]} : vector<3x16xf32> to vector<1x16xf32>
    %54 = vector.broadcast %42 : vector<16x1xf32> to vector<16x16xf32>
    %55 = vector.broadcast %53 : vector<1x16xf32> to vector<16x16xf32>
    %56 = arith.mulf %54, %55 : vector<16x16xf32>
    %57 = arith.addf %36, %56 : vector<16x16xf32>
    %58 = vector.extract_strided_slice %8 {offsets = [0, 16], sizes = [8, 8], strides = [1, 1]} : vector<8x128xbf16> to vector<8x8xbf16>
    %cst_21 = arith.constant dense<0.000000e+00> : vector<3x8xf32>
    %59 = tpu.matmul %11, %58, %cst_21 {dimension_numbers = #tpu.dot_dimension_numbers<[1], [0], [0], [1], [0, 0, 1, 1], [], []>} : vector<3x8xbf16>, vector<8x8xbf16>, vector<3x8xf32> -> vector<3x8xf32>
    %60 = vector.broadcast %12 : vector<3x1xf32> to vector<3x8xf32>
    %61 = arith.addf %59, %60 : vector<3x8xf32>
    %cst_22 = arith.constant dense<0.000000e+00> : vector<3x16xf32>
    %62 = tpu.matmul %61, %10, %cst_22 {dimension_numbers = #tpu.dot_dimension_numbers<[1], [0], [0], [1], [0, 0, 1, 1], [], []>} : vector<3x8xf32>, vector<8x16xf32>, vector<3x16xf32> -> vector<3x16xf32>
    %63 = vector.extract_strided_slice %9 {offsets = [0, 2], sizes = [16, 1], strides = [1, 1]} : vector<16x8xf32> to vector<16x1xf32>
    %64 = vector.extract_strided_slice %62 {offsets = [0, 0], sizes = [1, 16], strides = [1, 1]} : vector<3x16xf32> to vector<1x16xf32>
    %65 = vector.broadcast %63 : vector<16x1xf32> to vector<16x16xf32>
    %66 = vector.broadcast %64 : vector<1x16xf32> to vector<16x16xf32>
    %67 = arith.mulf %65, %66 : vector<16x16xf32>
    %68 = arith.addf %47, %67 : vector<16x16xf32>
    %69 = vector.extract_strided_slice %62 {offsets = [1, 0], sizes = [1, 16], strides = [1, 1]} : vector<3x16xf32> to vector<1x16xf32>
    %70 = vector.broadcast %63 : vector<16x1xf32> to vector<16x16xf32>
    %71 = vector.broadcast %69 : vector<1x16xf32> to vector<16x16xf32>
    %72 = arith.mulf %70, %71 : vector<16x16xf32>
    %73 = arith.addf %52, %72 : vector<16x16xf32>
    %74 = vector.extract_strided_slice %62 {offsets = [2, 0], sizes = [1, 16], strides = [1, 1]} : vector<3x16xf32> to vector<1x16xf32>
    %75 = vector.broadcast %63 : vector<16x1xf32> to vector<16x16xf32>
    %76 = vector.broadcast %74 : vector<1x16xf32> to vector<16x16xf32>
    %77 = arith.mulf %75, %76 : vector<16x16xf32>
    %78 = arith.addf %57, %77 : vector<16x16xf32>
    %79 = vector.extract_strided_slice %8 {offsets = [0, 24], sizes = [8, 8], strides = [1, 1]} : vector<8x128xbf16> to vector<8x8xbf16>
    %cst_23 = arith.constant dense<0.000000e+00> : vector<3x8xf32>
    %80 = tpu.matmul %11, %79, %cst_23 {dimension_numbers = #tpu.dot_dimension_numbers<[1], [0], [0], [1], [0, 0, 1, 1], [], []>} : vector<3x8xbf16>, vector<8x8xbf16>, vector<3x8xf32> -> vector<3x8xf32>
    %81 = vector.broadcast %12 : vector<3x1xf32> to vector<3x8xf32>
    %82 = arith.addf %80, %81 : vector<3x8xf32>
    %cst_24 = arith.constant dense<0.000000e+00> : vector<3x16xf32>
    %83 = tpu.matmul %82, %10, %cst_24 {dimension_numbers = #tpu.dot_dimension_numbers<[1], [0], [0], [1], [0, 0, 1, 1], [], []>} : vector<3x8xf32>, vector<8x16xf32>, vector<3x16xf32> -> vector<3x16xf32>
    %84 = vector.extract_strided_slice %9 {offsets = [0, 3], sizes = [16, 1], strides = [1, 1]} : vector<16x8xf32> to vector<16x1xf32>
    %85 = vector.extract_strided_slice %83 {offsets = [0, 0], sizes = [1, 16], strides = [1, 1]} : vector<3x16xf32> to vector<1x16xf32>
    %86 = vector.broadcast %84 : vector<16x1xf32> to vector<16x16xf32>
    %87 = vector.broadcast %85 : vector<1x16xf32> to vector<16x16xf32>
    %88 = arith.mulf %86, %87 : vector<16x16xf32>
    %89 = arith.addf %68, %88 : vector<16x16xf32>
    %90 = vector.extract_strided_slice %83 {offsets = [1, 0], sizes = [1, 16], strides = [1, 1]} : vector<3x16xf32> to vector<1x16xf32>
    %91 = vector.broadcast %84 : vector<16x1xf32> to vector<16x16xf32>
    %92 = vector.broadcast %90 : vector<1x16xf32> to vector<16x16xf32>
    %93 = arith.mulf %91, %92 : vector<16x16xf32>
    %94 = arith.addf %73, %93 : vector<16x16xf32>
    %95 = vector.extract_strided_slice %83 {offsets = [2, 0], sizes = [1, 16], strides = [1, 1]} : vector<3x16xf32> to vector<1x16xf32>
    %96 = vector.broadcast %84 : vector<16x1xf32> to vector<16x16xf32>
    %97 = vector.broadcast %95 : vector<1x16xf32> to vector<16x16xf32>
    %98 = arith.mulf %96, %97 : vector<16x16xf32>
    %99 = arith.addf %78, %98 : vector<16x16xf32>
    %100 = vector.extract_strided_slice %8 {offsets = [0, 32], sizes = [8, 8], strides = [1, 1]} : vector<8x128xbf16> to vector<8x8xbf16>
    %cst_25 = arith.constant dense<0.000000e+00> : vector<3x8xf32>
    %101 = tpu.matmul %11, %100, %cst_25 {dimension_numbers = #tpu.dot_dimension_numbers<[1], [0], [0], [1], [0, 0, 1, 1], [], []>} : vector<3x8xbf16>, vector<8x8xbf16>, vector<3x8xf32> -> vector<3x8xf32>
    %102 = vector.broadcast %12 : vector<3x1xf32> to vector<3x8xf32>
    %103 = arith.addf %101, %102 : vector<3x8xf32>
    %cst_26 = arith.constant dense<0.000000e+00> : vector<3x16xf32>
    %104 = tpu.matmul %103, %10, %cst_26 {dimension_numbers = #tpu.dot_dimension_numbers<[1], [0], [0], [1], [0, 0, 1, 1], [], []>} : vector<3x8xf32>, vector<8x16xf32>, vector<3x16xf32> -> vector<3x16xf32>
    %105 = vector.extract_strided_slice %9 {offsets = [0, 4], sizes = [16, 1], strides = [1, 1]} : vector<16x8xf32> to vector<16x1xf32>
    %106 = vector.extract_strided_slice %104 {offsets = [0, 0], sizes = [1, 16], strides = [1, 1]} : vector<3x16xf32> to vector<1x16xf32>
    %107 = vector.broadcast %105 : vector<16x1xf32> to vector<16x16xf32>
    %108 = vector.broadcast %106 : vector<1x16xf32> to vector<16x16xf32>
    %109 = arith.mulf %107, %108 : vector<16x16xf32>
    %110 = arith.addf %89, %109 : vector<16x16xf32>
    %111 = vector.extract_strided_slice %104 {offsets = [1, 0], sizes = [1, 16], strides = [1, 1]} : vector<3x16xf32> to vector<1x16xf32>
    %112 = vector.broadcast %105 : vector<16x1xf32> to vector<16x16xf32>
    %113 = vector.broadcast %111 : vector<1x16xf32> to vector<16x16xf32>
    %114 = arith.mulf %112, %113 : vector<16x16xf32>
    %115 = arith.addf %94, %114 : vector<16x16xf32>
    %116 = vector.extract_strided_slice %104 {offsets = [2, 0], sizes = [1, 16], strides = [1, 1]} : vector<3x16xf32> to vector<1x16xf32>
    %117 = vector.broadcast %105 : vector<16x1xf32> to vector<16x16xf32>
    %118 = vector.broadcast %116 : vector<1x16xf32> to vector<16x16xf32>
    %119 = arith.mulf %117, %118 : vector<16x16xf32>
    %120 = arith.addf %99, %119 : vector<16x16xf32>
    %121 = vector.extract_strided_slice %8 {offsets = [0, 40], sizes = [8, 8], strides = [1, 1]} : vector<8x128xbf16> to vector<8x8xbf16>
    %cst_27 = arith.constant dense<0.000000e+00> : vector<3x8xf32>
    %122 = tpu.matmul %11, %121, %cst_27 {dimension_numbers = #tpu.dot_dimension_numbers<[1], [0], [0], [1], [0, 0, 1, 1], [], []>} : vector<3x8xbf16>, vector<8x8xbf16>, vector<3x8xf32> -> vector<3x8xf32>
    %123 = vector.broadcast %12 : vector<3x1xf32> to vector<3x8xf32>
    %124 = arith.addf %122, %123 : vector<3x8xf32>
    %cst_28 = arith.constant dense<0.000000e+00> : vector<3x16xf32>
    %125 = tpu.matmul %124, %10, %cst_28 {dimension_numbers = #tpu.dot_dimension_numbers<[1], [0], [0], [1], [0, 0, 1, 1], [], []>} : vector<3x8xf32>, vector<8x16xf32>, vector<3x16xf32> -> vector<3x16xf32>
    %126 = vector.extract_strided_slice %9 {offsets = [0, 5], sizes = [16, 1], strides = [1, 1]} : vector<16x8xf32> to vector<16x1xf32>
    %127 = vector.extract_strided_slice %125 {offsets = [0, 0], sizes = [1, 16], strides = [1, 1]} : vector<3x16xf32> to vector<1x16xf32>
    %128 = vector.broadcast %126 : vector<16x1xf32> to vector<16x16xf32>
    %129 = vector.broadcast %127 : vector<1x16xf32> to vector<16x16xf32>
    %130 = arith.mulf %128, %129 : vector<16x16xf32>
    %131 = arith.addf %110, %130 : vector<16x16xf32>
    %132 = vector.extract_strided_slice %125 {offsets = [1, 0], sizes = [1, 16], strides = [1, 1]} : vector<3x16xf32> to vector<1x16xf32>
    %133 = vector.broadcast %126 : vector<16x1xf32> to vector<16x16xf32>
    %134 = vector.broadcast %132 : vector<1x16xf32> to vector<16x16xf32>
    %135 = arith.mulf %133, %134 : vector<16x16xf32>
    %136 = arith.addf %115, %135 : vector<16x16xf32>
    %137 = vector.extract_strided_slice %125 {offsets = [2, 0], sizes = [1, 16], strides = [1, 1]} : vector<3x16xf32> to vector<1x16xf32>
    %138 = vector.broadcast %126 : vector<16x1xf32> to vector<16x16xf32>
    %139 = vector.broadcast %137 : vector<1x16xf32> to vector<16x16xf32>
    %140 = arith.mulf %138, %139 : vector<16x16xf32>
    %141 = arith.addf %120, %140 : vector<16x16xf32>
    %142 = vector.extract_strided_slice %8 {offsets = [0, 48], sizes = [8, 8], strides = [1, 1]} : vector<8x128xbf16> to vector<8x8xbf16>
    %cst_29 = arith.constant dense<0.000000e+00> : vector<3x8xf32>
    %143 = tpu.matmul %11, %142, %cst_29 {dimension_numbers = #tpu.dot_dimension_numbers<[1], [0], [0], [1], [0, 0, 1, 1], [], []>} : vector<3x8xbf16>, vector<8x8xbf16>, vector<3x8xf32> -> vector<3x8xf32>
    %144 = vector.broadcast %12 : vector<3x1xf32> to vector<3x8xf32>
    %145 = arith.addf %143, %144 : vector<3x8xf32>
    %cst_30 = arith.constant dense<0.000000e+00> : vector<3x16xf32>
    %146 = tpu.matmul %145, %10, %cst_30 {dimension_numbers = #tpu.dot_dimension_numbers<[1], [0], [0], [1], [0, 0, 1, 1], [], []>} : vector<3x8xf32>, vector<8x16xf32>, vector<3x16xf32> -> vector<3x16xf32>
    %147 = vector.extract_strided_slice %9 {offsets = [0, 6], sizes = [16, 1], strides = [1, 1]} : vector<16x8xf32> to vector<16x1xf32>
    %148 = vector.extract_strided_slice %146 {offsets = [0, 0], sizes = [1, 16], strides = [1, 1]} : vector<3x16xf32> to vector<1x16xf32>
    %149 = vector.broadcast %147 : vector<16x1xf32> to vector<16x16xf32>
    %150 = vector.broadcast %148 : vector<1x16xf32> to vector<16x16xf32>
    %151 = arith.mulf %149, %150 : vector<16x16xf32>
    %152 = arith.addf %131, %151 : vector<16x16xf32>
    %153 = vector.extract_strided_slice %146 {offsets = [1, 0], sizes = [1, 16], strides = [1, 1]} : vector<3x16xf32> to vector<1x16xf32>
    %154 = vector.broadcast %147 : vector<16x1xf32> to vector<16x16xf32>
    %155 = vector.broadcast %153 : vector<1x16xf32> to vector<16x16xf32>
    %156 = arith.mulf %154, %155 : vector<16x16xf32>
    %157 = arith.addf %136, %156 : vector<16x16xf32>
    %158 = vector.extract_strided_slice %146 {offsets = [2, 0], sizes = [1, 16], strides = [1, 1]} : vector<3x16xf32> to vector<1x16xf32>
    %159 = vector.broadcast %147 : vector<16x1xf32> to vector<16x16xf32>
    %160 = vector.broadcast %158 : vector<1x16xf32> to vector<16x16xf32>
    %161 = arith.mulf %159, %160 : vector<16x16xf32>
    %162 = arith.addf %141, %161 : vector<16x16xf32>
    %163 = vector.extract_strided_slice %8 {offsets = [0, 56], sizes = [8, 8], strides = [1, 1]} : vector<8x128xbf16> to vector<8x8xbf16>
    %cst_31 = arith.constant dense<0.000000e+00> : vector<3x8xf32>
    %164 = tpu.matmul %11, %163, %cst_31 {dimension_numbers = #tpu.dot_dimension_numbers<[1], [0], [0], [1], [0, 0, 1, 1], [], []>} : vector<3x8xbf16>, vector<8x8xbf16>, vector<3x8xf32> -> vector<3x8xf32>
    %165 = vector.broadcast %12 : vector<3x1xf32> to vector<3x8xf32>
    %166 = arith.addf %164, %165 : vector<3x8xf32>
    %cst_32 = arith.constant dense<0.000000e+00> : vector<3x16xf32>
    %167 = tpu.matmul %166, %10, %cst_32 {dimension_numbers = #tpu.dot_dimension_numbers<[1], [0], [0], [1], [0, 0, 1, 1], [], []>} : vector<3x8xf32>, vector<8x16xf32>, vector<3x16xf32> -> vector<3x16xf32>
    %168 = vector.extract_strided_slice %9 {offsets = [0, 7], sizes = [16, 1], strides = [1, 1]} : vector<16x8xf32> to vector<16x1xf32>
    %169 = vector.extract_strided_slice %167 {offsets = [0, 0], sizes = [1, 16], strides = [1, 1]} : vector<3x16xf32> to vector<1x16xf32>
    %170 = vector.broadcast %168 : vector<16x1xf32> to vector<16x16xf32>
    %171 = vector.broadcast %169 : vector<1x16xf32> to vector<16x16xf32>
    %172 = arith.mulf %170, %171 : vector<16x16xf32>
    %173 = arith.addf %152, %172 : vector<16x16xf32>
    %174 = vector.extract_strided_slice %167 {offsets = [1, 0], sizes = [1, 16], strides = [1, 1]} : vector<3x16xf32> to vector<1x16xf32>
    %175 = vector.broadcast %168 : vector<16x1xf32> to vector<16x16xf32>
    %176 = vector.broadcast %174 : vector<1x16xf32> to vector<16x16xf32>
    %177 = arith.mulf %175, %176 : vector<16x16xf32>
    %178 = arith.addf %157, %177 : vector<16x16xf32>
    %179 = vector.extract_strided_slice %167 {offsets = [2, 0], sizes = [1, 16], strides = [1, 1]} : vector<3x16xf32> to vector<1x16xf32>
    %180 = vector.broadcast %168 : vector<16x1xf32> to vector<16x16xf32>
    %181 = vector.broadcast %179 : vector<1x16xf32> to vector<16x16xf32>
    %182 = arith.mulf %180, %181 : vector<16x16xf32>
    %183 = arith.addf %162, %182 : vector<16x16xf32>
    %c0_33 = arith.constant 0 : index
    %c0_34 = arith.constant 0 : index
    %c0_35 = arith.constant 0 : index
    %c0_36 = arith.constant 0 : index
    %184 = vector.load %arg7[%c0_33, %c0_34, %c0_35, %c0_36] : memref<2x3x16x16xf32, #tpu.memory_space<vmem>>, vector<1x1x16x16xf32>
    %185 = vector.shape_cast %184 : vector<1x1x16x16xf32> to vector<16x16xf32>
    %186 = vector.shape_cast %173 : vector<16x16xf32> to vector<1x1x16x16xf32>
    tpu.vector_store %arg7[%c0_33, %c0_34, %c0_35, %c0_36], %186 {strides = array<i32>} : memref<2x3x16x16xf32, #tpu.memory_space<vmem>>, vector<1x1x16x16xf32>,
    %c0_37 = arith.constant 0 : index
    %c1 = arith.constant 1 : index
    %c0_38 = arith.constant 0 : index
    %c0_39 = arith.constant 0 : index
    %187 = vector.load %arg7[%c0_37, %c1, %c0_38, %c0_39] : memref<2x3x16x16xf32, #tpu.memory_space<vmem>>, vector<1x1x16x16xf32>
    %188 = vector.shape_cast %187 : vector<1x1x16x16xf32> to vector<16x16xf32>
    %189 = vector.shape_cast %178 : vector<16x16xf32> to vector<1x1x16x16xf32>
    tpu.vector_store %arg7[%c0_37, %c1, %c0_38, %c0_39], %189 {strides = array<i32>} : memref<2x3x16x16xf32, #tpu.memory_space<vmem>>, vector<1x1x16x16xf32>,
    %c0_40 = arith.constant 0 : index
    %c2 = arith.constant 2 : index
    %c0_41 = arith.constant 0 : index
    %c0_42 = arith.constant 0 : index
    %190 = vector.load %arg7[%c0_40, %c2, %c0_41, %c0_42] : memref<2x3x16x16xf32, #tpu.memory_space<vmem>>, vector<1x1x16x16xf32>
    %191 = vector.shape_cast %190 : vector<1x1x16x16xf32> to vector<16x16xf32>
    %192 = vector.shape_cast %183 : vector<16x16xf32> to vector<1x1x16x16xf32>
    tpu.vector_store %arg7[%c0_40, %c2, %c0_41, %c0_42], %192 {strides = array<i32>} : memref<2x3x16x16xf32, #tpu.memory_space<vmem>>, vector<1x1x16x16xf32>,
    %cst_43 = arith.constant 0.000000e+00 : f32
    %193 = vector.broadcast %cst_43 : f32 to vector<16x16xf32>
    %cst_44 = arith.constant 0.000000e+00 : f32
    %194 = vector.broadcast %cst_44 : f32 to vector<16x16xf32>
    %cst_45 = arith.constant 0.000000e+00 : f32
    %195 = vector.broadcast %cst_45 : f32 to vector<16x16xf32>
    %196 = vector.extract_strided_slice %8 {offsets = [0, 64], sizes = [8, 8], strides = [1, 1]} : vector<8x128xbf16> to vector<8x8xbf16>
    %cst_46 = arith.constant dense<0.000000e+00> : vector<3x8xf32>
    %197 = tpu.matmul %11, %196, %cst_46 {dimension_numbers = #tpu.dot_dimension_numbers<[1], [0], [0], [1], [0, 0, 1, 1], [], []>} : vector<3x8xbf16>, vector<8x8xbf16>, vector<3x8xf32> -> vector<3x8xf32>
    %198 = vector.broadcast %12 : vector<3x1xf32> to vector<3x8xf32>
    %199 = arith.addf %197, %198 : vector<3x8xf32>
    %cst_47 = arith.constant dense<0.000000e+00> : vector<3x16xf32>
    %200 = tpu.matmul %199, %10, %cst_47 {dimension_numbers = #tpu.dot_dimension_numbers<[1], [0], [0], [1], [0, 0, 1, 1], [], []>} : vector<3x8xf32>, vector<8x16xf32>, vector<3x16xf32> -> vector<3x16xf32>
    %201 = vector.extract_strided_slice %9 {offsets = [0, 0], sizes = [16, 1], strides = [1, 1]} : vector<16x8xf32> to vector<16x1xf32>
    %202 = vector.extract_strided_slice %200 {offsets = [0, 0], sizes = [1, 16], strides = [1, 1]} : vector<3x16xf32> to vector<1x16xf32>
    %203 = vector.broadcast %201 : vector<16x1xf32> to vector<16x16xf32>
    %204 = vector.broadcast %202 : vector<1x16xf32> to vector<16x16xf32>
    %205 = arith.mulf %203, %204 : vector<16x16xf32>
    %206 = arith.addf %193, %205 : vector<16x16xf32>
    %207 = vector.extract_strided_slice %200 {offsets = [1, 0], sizes = [1, 16], strides = [1, 1]} : vector<3x16xf32> to vector<1x16xf32>
    %208 = vector.broadcast %201 : vector<16x1xf32> to vector<16x16xf32>
    %209 = vector.broadcast %207 : vector<1x16xf32> to vector<16x16xf32>
    %210 = arith.mulf %208, %209 : vector<16x16xf32>
    %211 = arith.addf %194, %210 : vector<16x16xf32>
    %212 = vector.extract_strided_slice %200 {offsets = [2, 0], sizes = [1, 16], strides = [1, 1]} : vector<3x16xf32> to vector<1x16xf32>
    %213 = vector.broadcast %201 : vector<16x1xf32> to vector<16x16xf32>
    %214 = vector.broadcast %212 : vector<1x16xf32> to vector<16x16xf32>
    %215 = arith.mulf %213, %214 : vector<16x16xf32>
    %216 = arith.addf %195, %215 : vector<16x16xf32>
    %217 = vector.extract_strided_slice %8 {offsets = [0, 72], sizes = [8, 8], strides = [1, 1]} : vector<8x128xbf16> to vector<8x8xbf16>
    %cst_48 = arith.constant dense<0.000000e+00> : vector<3x8xf32>
    %218 = tpu.matmul %11, %217, %cst_48 {dimension_numbers = #tpu.dot_dimension_numbers<[1], [0], [0], [1], [0, 0, 1, 1], [], []>} : vector<3x8xbf16>, vector<8x8xbf16>, vector<3x8xf32> -> vector<3x8xf32>
    %219 = vector.broadcast %12 : vector<3x1xf32> to vector<3x8xf32>
    %220 = arith.addf %218, %219 : vector<3x8xf32>
    %cst_49 = arith.constant dense<0.000000e+00> : vector<3x16xf32>
    %221 = tpu.matmul %220, %10, %cst_49 {dimension_numbers = #tpu.dot_dimension_numbers<[1], [0], [0], [1], [0, 0, 1, 1], [], []>} : vector<3x8xf32>, vector<8x16xf32>, vector<3x16xf32> -> vector<3x16xf32>
    %222 = vector.extract_strided_slice %9 {offsets = [0, 1], sizes = [16, 1], strides = [1, 1]} : vector<16x8xf32> to vector<16x1xf32>
    %223 = vector.extract_strided_slice %221 {offsets = [0, 0], sizes = [1, 16], strides = [1, 1]} : vector<3x16xf32> to vector<1x16xf32>
    %224 = vector.broadcast %222 : vector<16x1xf32> to vector<16x16xf32>
    %225 = vector.broadcast %223 : vector<1x16xf32> to vector<16x16xf32>
    %226 = arith.mulf %224, %225 : vector<16x16xf32>
    %227 = arith.addf %206, %226 : vector<16x16xf32>
    %228 = vector.extract_strided_slice %221 {offsets = [1, 0], sizes = [1, 16], strides = [1, 1]} : vector<3x16xf32> to vector<1x16xf32>
    %229 = vector.broadcast %222 : vector<16x1xf32> to vector<16x16xf32>
    %230 = vector.broadcast %228 : vector<1x16xf32> to vector<16x16xf32>
    %231 = arith.mulf %229, %230 : vector<16x16xf32>
    %232 = arith.addf %211, %231 : vector<16x16xf32>
    %233 = vector.extract_strided_slice %221 {offsets = [2, 0], sizes = [1, 16], strides = [1, 1]} : vector<3x16xf32> to vector<1x16xf32>
    %234 = vector.broadcast %222 : vector<16x1xf32> to vector<16x16xf32>
    %235 = vector.broadcast %233 : vector<1x16xf32> to vector<16x16xf32>
    %236 = arith.mulf %234, %235 : vector<16x16xf32>
    %237 = arith.addf %216, %236 : vector<16x16xf32>
    %238 = vector.extract_strided_slice %8 {offsets = [0, 80], sizes = [8, 8], strides = [1, 1]} : vector<8x128xbf16> to vector<8x8xbf16>
    %cst_50 = arith.constant dense<0.000000e+00> : vector<3x8xf32>
    %239 = tpu.matmul %11, %238, %cst_50 {dimension_numbers = #tpu.dot_dimension_numbers<[1], [0], [0], [1], [0, 0, 1, 1], [], []>} : vector<3x8xbf16>, vector<8x8xbf16>, vector<3x8xf32> -> vector<3x8xf32>
    %240 = vector.broadcast %12 : vector<3x1xf32> to vector<3x8xf32>
    %241 = arith.addf %239, %240 : vector<3x8xf32>
    %cst_51 = arith.constant dense<0.000000e+00> : vector<3x16xf32>
    %242 = tpu.matmul %241, %10, %cst_51 {dimension_numbers = #tpu.dot_dimension_numbers<[1], [0], [0], [1], [0, 0, 1, 1], [], []>} : vector<3x8xf32>, vector<8x16xf32>, vector<3x16xf32> -> vector<3x16xf32>
    %243 = vector.extract_strided_slice %9 {offsets = [0, 2], sizes = [16, 1], strides = [1, 1]} : vector<16x8xf32> to vector<16x1xf32>
    %244 = vector.extract_strided_slice %242 {offsets = [0, 0], sizes = [1, 16], strides = [1, 1]} : vector<3x16xf32> to vector<1x16xf32>
    %245 = vector.broadcast %243 : vector<16x1xf32> to vector<16x16xf32>
    %246 = vector.broadcast %244 : vector<1x16xf32> to vector<16x16xf32>
    %247 = arith.mulf %245, %246 : vector<16x16xf32>
    %248 = arith.addf %227, %247 : vector<16x16xf32>
    %249 = vector.extract_strided_slice %242 {offsets = [1, 0], sizes = [1, 16], strides = [1, 1]} : vector<3x16xf32> to vector<1x16xf32>
    %250 = vector.broadcast %243 : vector<16x1xf32> to vector<16x16xf32>
    %251 = vector.broadcast %249 : vector<1x16xf32> to vector<16x16xf32>
    %252 = arith.mulf %250, %251 : vector<16x16xf32>
    %253 = arith.addf %232, %252 : vector<16x16xf32>
    %254 = vector.extract_strided_slice %242 {offsets = [2, 0], sizes = [1, 16], strides = [1, 1]} : vector<3x16xf32> to vector<1x16xf32>
    %255 = vector.broadcast %243 : vector<16x1xf32> to vector<16x16xf32>
    %256 = vector.broadcast %254 : vector<1x16xf32> to vector<16x16xf32>
    %257 = arith.mulf %255, %256 : vector<16x16xf32>
    %258 = arith.addf %237, %257 : vector<16x16xf32>
    %259 = vector.extract_strided_slice %8 {offsets = [0, 88], sizes = [8, 8], strides = [1, 1]} : vector<8x128xbf16> to vector<8x8xbf16>
    %cst_52 = arith.constant dense<0.000000e+00> : vector<3x8xf32>
    %260 = tpu.matmul %11, %259, %cst_52 {dimension_numbers = #tpu.dot_dimension_numbers<[1], [0], [0], [1], [0, 0, 1, 1], [], []>} : vector<3x8xbf16>, vector<8x8xbf16>, vector<3x8xf32> -> vector<3x8xf32>
    %261 = vector.broadcast %12 : vector<3x1xf32> to vector<3x8xf32>
    %262 = arith.addf %260, %261 : vector<3x8xf32>
    %cst_53 = arith.constant dense<0.000000e+00> : vector<3x16xf32>
    %263 = tpu.matmul %262, %10, %cst_53 {dimension_numbers = #tpu.dot_dimension_numbers<[1], [0], [0], [1], [0, 0, 1, 1], [], []>} : vector<3x8xf32>, vector<8x16xf32>, vector<3x16xf32> -> vector<3x16xf32>
    %264 = vector.extract_strided_slice %9 {offsets = [0, 3], sizes = [16, 1], strides = [1, 1]} : vector<16x8xf32> to vector<16x1xf32>
    %265 = vector.extract_strided_slice %263 {offsets = [0, 0], sizes = [1, 16], strides = [1, 1]} : vector<3x16xf32> to vector<1x16xf32>
    %266 = vector.broadcast %264 : vector<16x1xf32> to vector<16x16xf32>
    %267 = vector.broadcast %265 : vector<1x16xf32> to vector<16x16xf32>
    %268 = arith.mulf %266, %267 : vector<16x16xf32>
    %269 = arith.addf %248, %268 : vector<16x16xf32>
    %270 = vector.extract_strided_slice %263 {offsets = [1, 0], sizes = [1, 16], strides = [1, 1]} : vector<3x16xf32> to vector<1x16xf32>
    %271 = vector.broadcast %264 : vector<16x1xf32> to vector<16x16xf32>
    %272 = vector.broadcast %270 : vector<1x16xf32> to vector<16x16xf32>
    %273 = arith.mulf %271, %272 : vector<16x16xf32>
    %274 = arith.addf %253, %273 : vector<16x16xf32>
    %275 = vector.extract_strided_slice %263 {offsets = [2, 0], sizes = [1, 16], strides = [1, 1]} : vector<3x16xf32> to vector<1x16xf32>
    %276 = vector.broadcast %264 : vector<16x1xf32> to vector<16x16xf32>
    %277 = vector.broadcast %275 : vector<1x16xf32> to vector<16x16xf32>
    %278 = arith.mulf %276, %277 : vector<16x16xf32>
    %279 = arith.addf %258, %278 : vector<16x16xf32>
    %280 = vector.extract_strided_slice %8 {offsets = [0, 96], sizes = [8, 8], strides = [1, 1]} : vector<8x128xbf16> to vector<8x8xbf16>
    %cst_54 = arith.constant dense<0.000000e+00> : vector<3x8xf32>
    %281 = tpu.matmul %11, %280, %cst_54 {dimension_numbers = #tpu.dot_dimension_numbers<[1], [0], [0], [1], [0, 0, 1, 1], [], []>} : vector<3x8xbf16>, vector<8x8xbf16>, vector<3x8xf32> -> vector<3x8xf32>
    %282 = vector.broadcast %12 : vector<3x1xf32> to vector<3x8xf32>
    %283 = arith.addf %281, %282 : vector<3x8xf32>
    %cst_55 = arith.constant dense<0.000000e+00> : vector<3x16xf32>
    %284 = tpu.matmul %283, %10, %cst_55 {dimension_numbers = #tpu.dot_dimension_numbers<[1], [0], [0], [1], [0, 0, 1, 1], [], []>} : vector<3x8xf32>, vector<8x16xf32>, vector<3x16xf32> -> vector<3x16xf32>
    %285 = vector.extract_strided_slice %9 {offsets = [0, 4], sizes = [16, 1], strides = [1, 1]} : vector<16x8xf32> to vector<16x1xf32>
    %286 = vector.extract_strided_slice %284 {offsets = [0, 0], sizes = [1, 16], strides = [1, 1]} : vector<3x16xf32> to vector<1x16xf32>
    %287 = vector.broadcast %285 : vector<16x1xf32> to vector<16x16xf32>
    %288 = vector.broadcast %286 : vector<1x16xf32> to vector<16x16xf32>
    %289 = arith.mulf %287, %288 : vector<16x16xf32>
    %290 = arith.addf %269, %289 : vector<16x16xf32>
    %291 = vector.extract_strided_slice %284 {offsets = [1, 0], sizes = [1, 16], strides = [1, 1]} : vector<3x16xf32> to vector<1x16xf32>
    %292 = vector.broadcast %285 : vector<16x1xf32> to vector<16x16xf32>
    %293 = vector.broadcast %291 : vector<1x16xf32> to vector<16x16xf32>
    %294 = arith.mulf %292, %293 : vector<16x16xf32>
    %295 = arith.addf %274, %294 : vector<16x16xf32>
    %296 = vector.extract_strided_slice %284 {offsets = [2, 0], sizes = [1, 16], strides = [1, 1]} : vector<3x16xf32> to vector<1x16xf32>
    %297 = vector.broadcast %285 : vector<16x1xf32> to vector<16x16xf32>
    %298 = vector.broadcast %296 : vector<1x16xf32> to vector<16x16xf32>
    %299 = arith.mulf %297, %298 : vector<16x16xf32>
    %300 = arith.addf %279, %299 : vector<16x16xf32>
    %301 = vector.extract_strided_slice %8 {offsets = [0, 104], sizes = [8, 8], strides = [1, 1]} : vector<8x128xbf16> to vector<8x8xbf16>
    %cst_56 = arith.constant dense<0.000000e+00> : vector<3x8xf32>
    %302 = tpu.matmul %11, %301, %cst_56 {dimension_numbers = #tpu.dot_dimension_numbers<[1], [0], [0], [1], [0, 0, 1, 1], [], []>} : vector<3x8xbf16>, vector<8x8xbf16>, vector<3x8xf32> -> vector<3x8xf32>
    %303 = vector.broadcast %12 : vector<3x1xf32> to vector<3x8xf32>
    %304 = arith.addf %302, %303 : vector<3x8xf32>
    %cst_57 = arith.constant dense<0.000000e+00> : vector<3x16xf32>
    %305 = tpu.matmul %304, %10, %cst_57 {dimension_numbers = #tpu.dot_dimension_numbers<[1], [0], [0], [1], [0, 0, 1, 1], [], []>} : vector<3x8xf32>, vector<8x16xf32>, vector<3x16xf32> -> vector<3x16xf32>
    %306 = vector.extract_strided_slice %9 {offsets = [0, 5], sizes = [16, 1], strides = [1, 1]} : vector<16x8xf32> to vector<16x1xf32>
    %307 = vector.extract_strided_slice %305 {offsets = [0, 0], sizes = [1, 16], strides = [1, 1]} : vector<3x16xf32> to vector<1x16xf32>
    %308 = vector.broadcast %306 : vector<16x1xf32> to vector<16x16xf32>
    %309 = vector.broadcast %307 : vector<1x16xf32> to vector<16x16xf32>
    %310 = arith.mulf %308, %309 : vector<16x16xf32>
    %311 = arith.addf %290, %310 : vector<16x16xf32>
    %312 = vector.extract_strided_slice %305 {offsets = [1, 0], sizes = [1, 16], strides = [1, 1]} : vector<3x16xf32> to vector<1x16xf32>
    %313 = vector.broadcast %306 : vector<16x1xf32> to vector<16x16xf32>
    %314 = vector.broadcast %312 : vector<1x16xf32> to vector<16x16xf32>
    %315 = arith.mulf %313, %314 : vector<16x16xf32>
    %316 = arith.addf %295, %315 : vector<16x16xf32>
    %317 = vector.extract_strided_slice %305 {offsets = [2, 0], sizes = [1, 16], strides = [1, 1]} : vector<3x16xf32> to vector<1x16xf32>
    %318 = vector.broadcast %306 : vector<16x1xf32> to vector<16x16xf32>
    %319 = vector.broadcast %317 : vector<1x16xf32> to vector<16x16xf32>
    %320 = arith.mulf %318, %319 : vector<16x16xf32>
    %321 = arith.addf %300, %320 : vector<16x16xf32>
    %322 = vector.extract_strided_slice %8 {offsets = [0, 112], sizes = [8, 8], strides = [1, 1]} : vector<8x128xbf16> to vector<8x8xbf16>
    %cst_58 = arith.constant dense<0.000000e+00> : vector<3x8xf32>
    %323 = tpu.matmul %11, %322, %cst_58 {dimension_numbers = #tpu.dot_dimension_numbers<[1], [0], [0], [1], [0, 0, 1, 1], [], []>} : vector<3x8xbf16>, vector<8x8xbf16>, vector<3x8xf32> -> vector<3x8xf32>
    %324 = vector.broadcast %12 : vector<3x1xf32> to vector<3x8xf32>
    %325 = arith.addf %323, %324 : vector<3x8xf32>
    %cst_59 = arith.constant dense<0.000000e+00> : vector<3x16xf32>
    %326 = tpu.matmul %325, %10, %cst_59 {dimension_numbers = #tpu.dot_dimension_numbers<[1], [0], [0], [1], [0, 0, 1, 1], [], []>} : vector<3x8xf32>, vector<8x16xf32>, vector<3x16xf32> -> vector<3x16xf32>
    %327 = vector.extract_strided_slice %9 {offsets = [0, 6], sizes = [16, 1], strides = [1, 1]} : vector<16x8xf32> to vector<16x1xf32>
    %328 = vector.extract_strided_slice %326 {offsets = [0, 0], sizes = [1, 16], strides = [1, 1]} : vector<3x16xf32> to vector<1x16xf32>
    %329 = vector.broadcast %327 : vector<16x1xf32> to vector<16x16xf32>
    %330 = vector.broadcast %328 : vector<1x16xf32> to vector<16x16xf32>
    %331 = arith.mulf %329, %330 : vector<16x16xf32>
    %332 = arith.addf %311, %331 : vector<16x16xf32>
    %333 = vector.extract_strided_slice %326 {offsets = [1, 0], sizes = [1, 16], strides = [1, 1]} : vector<3x16xf32> to vector<1x16xf32>
    %334 = vector.broadcast %327 : vector<16x1xf32> to vector<16x16xf32>
    %335 = vector.broadcast %333 : vector<1x16xf32> to vector<16x16xf32>
    %336 = arith.mulf %334, %335 : vector<16x16xf32>
    %337 = arith.addf %316, %336 : vector<16x16xf32>
    %338 = vector.extract_strided_slice %326 {offsets = [2, 0], sizes = [1, 16], strides = [1, 1]} : vector<3x16xf32> to vector<1x16xf32>
    %339 = vector.broadcast %327 : vector<16x1xf32> to vector<16x16xf32>
    %340 = vector.broadcast %338 : vector<1x16xf32> to vector<16x16xf32>
    %341 = arith.mulf %339, %340 : vector<16x16xf32>
    %342 = arith.addf %321, %341 : vector<16x16xf32>
    %343 = vector.extract_strided_slice %8 {offsets = [0, 120], sizes = [8, 8], strides = [1, 1]} : vector<8x128xbf16> to vector<8x8xbf16>
    %cst_60 = arith.constant dense<0.000000e+00> : vector<3x8xf32>
    %344 = tpu.matmul %11, %343, %cst_60 {dimension_numbers = #tpu.dot_dimension_numbers<[1], [0], [0], [1], [0, 0, 1, 1], [], []>} : vector<3x8xbf16>, vector<8x8xbf16>, vector<3x8xf32> -> vector<3x8xf32>
    %345 = vector.broadcast %12 : vector<3x1xf32> to vector<3x8xf32>
    %346 = arith.addf %344, %345 : vector<3x8xf32>
    %cst_61 = arith.constant dense<0.000000e+00> : vector<3x16xf32>
    %347 = tpu.matmul %346, %10, %cst_61 {dimension_numbers = #tpu.dot_dimension_numbers<[1], [0], [0], [1], [0, 0, 1, 1], [], []>} : vector<3x8xf32>, vector<8x16xf32>, vector<3x16xf32> -> vector<3x16xf32>
    %348 = vector.extract_strided_slice %9 {offsets = [0, 7], sizes = [16, 1], strides = [1, 1]} : vector<16x8xf32> to vector<16x1xf32>
    %349 = vector.extract_strided_slice %347 {offsets = [0, 0], sizes = [1, 16], strides = [1, 1]} : vector<3x16xf32> to vector<1x16xf32>
    %350 = vector.broadcast %348 : vector<16x1xf32> to vector<16x16xf32>
    %351 = vector.broadcast %349 : vector<1x16xf32> to vector<16x16xf32>
    %352 = arith.mulf %350, %351 : vector<16x16xf32>
    %353 = arith.addf %332, %352 : vector<16x16xf32>
    %354 = vector.extract_strided_slice %347 {offsets = [1, 0], sizes = [1, 16], strides = [1, 1]} : vector<3x16xf32> to vector<1x16xf32>
    %355 = vector.broadcast %348 : vector<16x1xf32> to vector<16x16xf32>
    %356 = vector.broadcast %354 : vector<1x16xf32> to vector<16x16xf32>
    %357 = arith.mulf %355, %356 : vector<16x16xf32>
    %358 = arith.addf %337, %357 : vector<16x16xf32>
    %359 = vector.extract_strided_slice %347 {offsets = [2, 0], sizes = [1, 16], strides = [1, 1]} : vector<3x16xf32> to vector<1x16xf32>
    %360 = vector.broadcast %348 : vector<16x1xf32> to vector<16x16xf32>
    %361 = vector.broadcast %359 : vector<1x16xf32> to vector<16x16xf32>
    %362 = arith.mulf %360, %361 : vector<16x16xf32>
    %363 = arith.addf %342, %362 : vector<16x16xf32>
    %c1_62 = arith.constant 1 : index
    %c0_63 = arith.constant 0 : index
    %c0_64 = arith.constant 0 : index
    %c0_65 = arith.constant 0 : index
    %364 = vector.load %arg7[%c1_62, %c0_63, %c0_64, %c0_65] : memref<2x3x16x16xf32, #tpu.memory_space<vmem>>, vector<1x1x16x16xf32>
    %365 = vector.shape_cast %364 : vector<1x1x16x16xf32> to vector<16x16xf32>
    %366 = vector.shape_cast %353 : vector<16x16xf32> to vector<1x1x16x16xf32>
    tpu.vector_store %arg7[%c1_62, %c0_63, %c0_64, %c0_65], %366 {strides = array<i32>} : memref<2x3x16x16xf32, #tpu.memory_space<vmem>>, vector<1x1x16x16xf32>,
    %c1_66 = arith.constant 1 : index
    %c1_67 = arith.constant 1 : index
    %c0_68 = arith.constant 0 : index
    %c0_69 = arith.constant 0 : index
    %367 = vector.load %arg7[%c1_66, %c1_67, %c0_68, %c0_69] : memref<2x3x16x16xf32, #tpu.memory_space<vmem>>, vector<1x1x16x16xf32>
    %368 = vector.shape_cast %367 : vector<1x1x16x16xf32> to vector<16x16xf32>
    %369 = vector.shape_cast %358 : vector<16x16xf32> to vector<1x1x16x16xf32>
    tpu.vector_store %arg7[%c1_66, %c1_67, %c0_68, %c0_69], %369 {strides = array<i32>} : memref<2x3x16x16xf32, #tpu.memory_space<vmem>>, vector<1x1x16x16xf32>,
    %c1_70 = arith.constant 1 : index
    %c2_71 = arith.constant 2 : index
    %c0_72 = arith.constant 0 : index
    %c0_73 = arith.constant 0 : index
    %370 = vector.load %arg7[%c1_70, %c2_71, %c0_72, %c0_73] : memref<2x3x16x16xf32, #tpu.memory_space<vmem>>, vector<1x1x16x16xf32>
    %371 = vector.shape_cast %370 : vector<1x1x16x16xf32> to vector<16x16xf32>
    %372 = vector.shape_cast %363 : vector<16x16xf32> to vector<1x1x16x16xf32>
    tpu.vector_store %arg7[%c1_70, %c2_71, %c0_72, %c0_73], %372 {strides = array<i32>} : memref<2x3x16x16xf32, #tpu.memory_space<vmem>>, vector<1x1x16x16xf32>,
    return
  }
}

</mosaic_0001>

<llo_original>
// kernel: tpu_custom_call.1
$region0: #{tpu_custom_call.1}
  #allocation0 [shape = 'u32[]', space=smem, size = 0x4, offset = 0x4, fixed_abs, tag = 'smem constant byte address 0x4 - core index']
  #allocation1 [shape = 'u32[72,128]{1,0:T(1,128)}', space=vmem, size = 0x9000, scoped, tag = 'internal scratch']
  %s0 = inlined_call_operand.vmem [shape: bf16[36,128], index: 0, kind: input, shape index: {}]
  %s1 = inlined_call_operand.hbm [shape: bf16[8,36], index: 1, kind: input, shape index: {}]
  %s2 = inlined_call_operand.vmem [shape: f32[8,1], index: 2, kind: input, shape index: {}]
  %s3 = inlined_call_operand.vmem [shape: bf16[3,8], index: 3, kind: input, shape index: {}]
  %s4 = inlined_call_operand.vmem [shape: f32[3,1], index: 4, kind: input, shape index: {}]
  %s5 = inlined_call_operand.vmem [shape: f32[16,8], index: 5, kind: input, shape index: {}]
  %s6 = inlined_call_operand.vmem [shape: f32[8,16], index: 6, kind: input, shape index: {}]
  %s7 = inlined_call_operand.hbm [shape: f32[2,3,16,16], index: 7, kind: output, shape index: {}]
  %s8 = sld [smem:[#allocation0]]
  $region42: #{tpu_custom_call.1} parent=0
    _
  %s10 = ssub.s32 1, %s8
  %s11 = scalar_select 0, %s10, %s8
  $region1: #{tpu_custom_call.1} parent=0
    #allocation2 [shape = 'u8[2048]{0}', space=vmem, size = 0x800, scoped, tag = 'input window, operand 1, single buffered']
    #allocation3 [shape = 's32[1]{0}', space=sflag, size = 0x4, scoped, tag = 'scoped memory for tpu_custom_call.1']
    #allocation4 [shape = 's32[1]{0}', space=sflag, size = 0x4, scoped, tag = 'scoped memory for tpu_custom_call.1']
    #allocation5 [shape = 'u8[49152]{0}', space=vmem, size = 0xc000, scoped, tag = 'output window, operand 0, single buffered']
    %12 = vsyncpa [#allocation3], 0
    %13 = vsyncpa [#allocation4], 0
    // Predicated region
    $region2: #{tpu_custom_call.1} parent=1 // pred_check
      _
    $region3: #{tpu_custom_call.1} parent=1 // pred_check_branch
      %15 = sbr.rel (0) target = $region5
    $region4: #{tpu_custom_call.1} parent=1 // pred_region
      _
    $region5: #{tpu_custom_call.1} parent=1 // pred_fallthru
      _
    // Predicated region
    $region6: #{tpu_custom_call.1} parent=1 // pred_check
      _
    $region7: #{tpu_custom_call.1} parent=1 // pred_check_branch
      %17 = sbr.rel (0) target = $region9
    $region8: #{tpu_custom_call.1} parent=1 // pred_region
      %19 = vsyncadd [#allocation3], 0
      %s21 = sshll.u32 %s1, 4
      %s22 = int_to_ptr.hbm [resolvable:$true] %s21
      %s23 = sshll.u32 [#allocation2], 4
      %s24 = int_to_ptr.vmem [resolvable:$true] %s23
      %26 = dma.hbm_to_vmem [thread:$0]  %s22, 64, %s24, [#allocation3]
    $region9: #{tpu_custom_call.1} parent=1 // pred_fallthru
      _
    // Predicated region
    $region10: #{tpu_custom_call.1} parent=1 // pred_check
      _
    $region11: #{tpu_custom_call.1} parent=1 // pred_check_branch
      %28 = sbr.rel (0) target = $region13
    $region12: #{tpu_custom_call.1} parent=1 // pred_region
      _
    $region13: #{tpu_custom_call.1} parent=1 // pred_fallthru
      _
    // Predicated region
    $region14: #{tpu_custom_call.1} parent=1 // pred_check
      _
    $region15: #{tpu_custom_call.1} parent=1 // pred_check_branch
      %30 = sbr.rel (0) target = $region17
    $region16: #{tpu_custom_call.1} parent=1 // pred_region
      _
    $region17: #{tpu_custom_call.1} parent=1 // pred_fallthru
      _
    // Predicated region
    $region18: #{tpu_custom_call.1} parent=1 // pred_check
      _
    $region19: #{tpu_custom_call.1} parent=1 // pred_check_branch
      %32 = sbr.rel (0) target = $region21
    $region20: #{tpu_custom_call.1} parent=1 // pred_region
      _
    $region21: #{tpu_custom_call.1} parent=1 // pred_fallthru
      _
    // Predicated region
    $region22: #{tpu_custom_call.1} parent=1 // pred_check
      _
    $region23: #{tpu_custom_call.1} parent=1 // pred_check_branch
      %34 = sbr.rel (0) target = $region25
    $region24: #{tpu_custom_call.1} parent=1 // pred_region
      _
    $region25: #{tpu_custom_call.1} parent=1 // pred_fallthru
      _
    // Predicated region
    $region26: #{tpu_custom_call.1} parent=1 // pred_check
      _
    $region27: #{tpu_custom_call.1} parent=1 // pred_check_branch
      %36 = sbr.rel (0) target = $region29
    $region28: #{tpu_custom_call.1} parent=1 // pred_region
      _
    $region29: #{tpu_custom_call.1} parent=1 // pred_fallthru
      _
    // Predicated region
    $region30: #{tpu_custom_call.1} parent=1 // pred_check
      _
    $region31: #{tpu_custom_call.1} parent=1 // pred_check_branch
      %38 = sbr.rel (0) target = $region33
    $region32: #{tpu_custom_call.1} parent=1 // pred_region
      %40 = dma.done [#allocation3], 64
    $region33: #{tpu_custom_call.1} parent=1 // pred_fallthru
      _
    %v42 = vld [vmem:[#allocation2] sm:$0xf]
    %v43 = vld [vmem:[%s0] sm:$0xf]
    %v44 = vld [vmem:[%s0 + $0x4] sm:$0xf]
    %v45 = vld [vmem:[%s0 + $0x8] sm:$0xf]
    %v46 = vld [vmem:[%s0 + $0xc] sm:$0xf]
    %v47 = vld [vmem:[%s0 + $0x10] sm:$0x3]
    %v48 = vld [vmem:[%s2] sm:$0xff]
    %50 = vset.pattern.permute.xlu0 0
    %51 = vperm.xlu0 %50, %v48
    %v52 = vpop.permute.xlu0 %51
    %v59 = vunpack.c.l.b16 %v43
    %v60 = vunpack.c.l.b16 %v44
    %v61 = vunpack.c.l.b16 %v45
    %v62 = vunpack.c.l.b16 %v46
    %v63 = vunpack.c.l.b16 %v47
    %v64 = vpack.c.b16 %v60, %v59
    %v65 = vpack.c.b16 %v62, %v61
    %v66 = vpack.c.b16 %v63, %v63
    %vm69 = vcmask 293888
    %v71 = vsel %vm69, %v42, 0
    %vm73 = vcmask 1041408
    %v75 = vsel %vm73, %v66, 0
    %77 = vmatpush.bf16.msra.mxu0 0
    %78 = vmatpush.bf16.msra.mxu0 0
    %79 = vmatpush.bf16.msra.mxu0 0
    %80 = vmatpush.bf16.msra.mxu0 0
    %81 = vmatpush.bf16.msra.mxu0 0
    %82 = vmatpush.bf16.msra.mxu0 %v75
    %83 = vmatpush.bf16.msra.mxu0 %v65
    %84 = vmatpush.bf16.msra.mxu0 %v64
    %85 = vmatmul.bf16.gmra.mxu0 %v71
    %v86 = vpop.f32.mrf.mxu0
    %v87 = vadd.f32 %v52, %v86
    %v88 = vpop.f32.mrf.mxu0
    %89 = vdwg.mxu0
    %v90 = vmax.f32 %v87, 0.0
    %v91 = vpack.c.bf16 %v90, %v90
    %v92 = vld [vmem:[%s5] sm:$0xff]
    %v93 = vld [vmem:[%s5 + $0x8] sm:$0xff]
    %v94 = vld [vmem:[%s6] sm:$0xff]
    %v95 = vld [vmem:[%s3] sm:$0x3]
    %v96 = vld [vmem:[%s4] sm:$0x7]
    %98 = vset.pattern.permute.xlu0 0
    %99 = vperm.xlu0 %98, %v96
    %v100 = vpop.permute.xlu0 %99
    %vm102 = vcmask 64512
    %v104 = vsel %vm102, %v95, 0
    %vm106 = vcmask 1043456
    %v108 = vsel %vm106, %v91, 0
    %110 = vmatpush.bf16.msra.mxu0 0
    %111 = vmatpush.bf16.msra.mxu0 0
    %112 = vmatpush.bf16.msra.mxu0 0
    %113 = vmatpush.bf16.msra.mxu0 0
    %114 = vmatpush.bf16.msra.mxu0 0
    %115 = vmatpush.bf16.msra.mxu0 0
    %116 = vmatpush.bf16.msra.mxu0 0
    %117 = vmatpush.bf16.msra.mxu0 %v108
    %118 = vmatmul.bf16.gmra.mxu0 %v104
    %v119 = vpop.f32.mrf.mxu0
    %v120 = vadd.f32 %v100, %v119
    %v121 = vpop.f32.mrf.mxu0
    %122 = vdwg.mxu0
    %v124 = vsel %vm102, %v120, 0
    %126 = vmatpush.msra.mxu0 0.0
    %127 = vmatpush.msra.mxu0 0.0
    %128 = vmatpush.msra.mxu0 0.0
    %129 = vmatpush.msra.mxu0 0.0
    %130 = vmatpush.msra.mxu0 0.0
    %131 = vmatpush.msra.mxu0 0.0
    %132 = vmatpush.msra.mxu0 0.0
    %133 = vmatpush.msra.mxu0 0.0
    %134 = vmatpush.msra.mxu0 0.0
    %135 = vmatpush.msra.mxu0 0.0
    %136 = vmatpush.msra.mxu0 0.0
    %137 = vmatpush.msra.mxu0 0.0
    %138 = vmatpush.msra.mxu0 0.0
    %139 = vmatpush.msra.mxu0 0.0
    %140 = vmatpush.msra.mxu0 0.0
    %141 = vmatpush.msra.mxu0 %v94
    %142 = vmatmul.f32.gmra.mxu0 %v124
    %v143 = vpop.f32.mrf.mxu0
    %v144 = vadd.f32 0.0, %v143
    %145 = vdwg.mxu0
    %147 = vset.pattern.permute.xlu0 0
    %148 = vperm.xlu0 %147, %v92
    %v149 = vpop.permute.xlu0 %148
    %152 = vset.pattern.permute.xlu0 0
    %153 = vperm.xlu0 %152, %v93
    %v154 = vpop.permute.xlu0 %153
    %v156 = vperm.slane %v144, 0
    %v157 = vmul.f32 %v149, %v156
    %v158 = vmul.f32 %v154, %v156
    %v159 = vadd.f32 %v157, 0.0
    %v160 = vadd.f32 %v158, 0.0
    %v161 = vperm.slane %v144, 1
    %v162 = vmul.f32 %v149, %v161
    %v163 = vmul.f32 %v154, %v161
    %v164 = vadd.f32 %v162, 0.0
    %v165 = vadd.f32 %v163, 0.0
    %v166 = vperm.slane %v144, 2
    %v167 = vmul.f32 %v149, %v166
    %v168 = vmul.f32 %v154, %v166
    %v169 = vadd.f32 %v167, 0.0
    %v170 = vadd.f32 %v168, 0.0
    %v172 = vunpack.c.l.b16 %v91
    %v173 = vpack.c.b16 %v172, %v172
    %174 = vrot.lane.b32.xlu0 %v173, 120
    %v175 = vpop.permute.xlu0 %174
    %v177 = vsel %vm106, %v175, 0
    %179 = vmatpush.bf16.msra.mxu0 0
    %180 = vmatpush.bf16.msra.mxu0 0
    %181 = vmatpush.bf16.msra.mxu0 0
    %182 = vmatpush.bf16.msra.mxu0 0
    %183 = vmatpush.bf16.msra.mxu0 0
    %184 = vmatpush.bf16.msra.mxu0 0
    %185 = vmatpush.bf16.msra.mxu0 0
    %186 = vmatpush.bf16.msra.mxu0 %v177
    %187 = vmatmul.bf16.gmra.mxu0 %v104
    %v188 = vpop.f32.mrf.mxu0
    %v189 = vadd.f32 %v100, %v188
    %v190 = vpop.f32.mrf.mxu0
    %191 = vdwg.mxu0
    %v193 = vsel %vm102, %v189, 0
    %195 = vmatpush.msra.mxu0 0.0
    %196 = vmatpush.msra.mxu0 0.0
    %197 = vmatpush.msra.mxu0 0.0
    %198 = vmatpush.msra.mxu0 0.0
    %199 = vmatpush.msra.mxu0 0.0
    %200 = vmatpush.msra.mxu0 0.0
    %201 = vmatpush.msra.mxu0 0.0
    %202 = vmatpush.msra.mxu0 0.0
    %203 = vmatpush.msra.mxu0 0.0
    %204 = vmatpush.msra.mxu0 0.0
    %205 = vmatpush.msra.mxu0 0.0
    %206 = vmatpush.msra.mxu0 0.0
    %207 = vmatpush.msra.mxu0 0.0
    %208 = vmatpush.msra.mxu0 0.0
    %209 = vmatpush.msra.mxu0 0.0
    %210 = vmatpush.msra.mxu0 %v94
    %211 = vmatmul.f32.gmra.mxu0 %v193
    %v212 = vpop.f32.mrf.mxu0
    %v213 = vadd.f32 0.0, %v212
    %214 = vdwg.mxu0
    %215 = vset.pattern.permute.xlu0 1
    %216 = vperm.xlu0 %215, %v92
    %v217 = vpop.permute.xlu0 %216
    %219 = vset.pattern.permute.xlu0 1
    %220 = vperm.xlu0 %219, %v93
    %v221 = vpop.permute.xlu0 %220
    %v223 = vperm.slane %v213, 0
    %v224 = vmul.f32 %v217, %v223
    %v225 = vmul.f32 %v221, %v223
    %v226 = vadd.f32 %v159, %v224
    %v227 = vadd.f32 %v160, %v225
    %v228 = vperm.slane %v213, 1
    %v229 = vmul.f32 %v217, %v228
    %v230 = vmul.f32 %v221, %v228
    %v231 = vadd.f32 %v164, %v229
    %v232 = vadd.f32 %v165, %v230
    %v233 = vperm.slane %v213, 2
    %v234 = vmul.f32 %v217, %v233
    %v235 = vmul.f32 %v221, %v233
    %v236 = vadd.f32 %v169, %v234
    %v237 = vadd.f32 %v170, %v235
    %238 = vrot.lane.b32.xlu0 %v173, 112
    %v239 = vpop.permute.xlu0 %238
    %v241 = vsel %vm106, %v239, 0
    %243 = vmatpush.bf16.msra.mxu0 0
    %244 = vmatpush.bf16.msra.mxu0 0
    %245 = vmatpush.bf16.msra.mxu0 0
    %246 = vmatpush.bf16.msra.mxu0 0
    %247 = vmatpush.bf16.msra.mxu0 0
    %248 = vmatpush.bf16.msra.mxu0 0
    %249 = vmatpush.bf16.msra.mxu0 0
    %250 = vmatpush.bf16.msra.mxu0 %v241
    %251 = vmatmul.bf16.gmra.mxu0 %v104
    %v252 = vpop.f32.mrf.mxu0
    %v253 = vadd.f32 %v100, %v252
    %v254 = vpop.f32.mrf.mxu0
    %255 = vdwg.mxu0
    %v257 = vsel %vm102, %v253, 0
    %259 = vmatpush.msra.mxu0 0.0
    %260 = vmatpush.msra.mxu0 0.0
    %261 = vmatpush.msra.mxu0 0.0
    %262 = vmatpush.msra.mxu0 0.0
    %263 = vmatpush.msra.mxu0 0.0
    %264 = vmatpush.msra.mxu0 0.0
    %265 = vmatpush.msra.mxu0 0.0
    %266 = vmatpush.msra.mxu0 0.0
    %267 = vmatpush.msra.mxu0 0.0
    %268 = vmatpush.msra.mxu0 0.0
    %269 = vmatpush.msra.mxu0 0.0
    %270 = vmatpush.msra.mxu0 0.0
    %271 = vmatpush.msra.mxu0 0.0
    %272 = vmatpush.msra.mxu0 0.0
    %273 = vmatpush.msra.mxu0 0.0
    %274 = vmatpush.msra.mxu0 %v94
    %275 = vmatmul.f32.gmra.mxu0 %v257
    %v276 = vpop.f32.mrf.mxu0
    %v277 = vadd.f32 0.0, %v276
    %278 = vdwg.mxu0
    %279 = vset.pattern.permute.xlu0 2
    %280 = vperm.xlu0 %279, %v92
    %v281 = vpop.permute.xlu0 %280
    %283 = vset.pattern.permute.xlu0 2
    %284 = vperm.xlu0 %283, %v93
    %v285 = vpop.permute.xlu0 %284
    %v287 = vperm.slane %v277, 0
    %v288 = vmul.f32 %v281, %v287
    %v289 = vmul.f32 %v285, %v287
    %v290 = vadd.f32 %v226, %v288
    %v291 = vadd.f32 %v227, %v289
    %v292 = vperm.slane %v277, 1
    %v293 = vmul.f32 %v281, %v292
    %v294 = vmul.f32 %v285, %v292
    %v295 = vadd.f32 %v231, %v293
    %v296 = vadd.f32 %v232, %v294
    %v297 = vperm.slane %v277, 2
    %v298 = vmul.f32 %v281, %v297
    %v299 = vmul.f32 %v285, %v297
    %v300 = vadd.f32 %v236, %v298
    %v301 = vadd.f32 %v237, %v299
    %302 = vrot.lane.b32.xlu0 %v173, 104
    %v303 = vpop.permute.xlu0 %302
    %v305 = vsel %vm106, %v303, 0
    %307 = vmatpush.bf16.msra.mxu0 0
    %308 = vmatpush.bf16.msra.mxu0 0
    %309 = vmatpush.bf16.msra.mxu0 0
    %310 = vmatpush.bf16.msra.mxu0 0
    %311 = vmatpush.bf16.msra.mxu0 0
    %312 = vmatpush.bf16.msra.mxu0 0
    %313 = vmatpush.bf16.msra.mxu0 0
    %314 = vmatpush.bf16.msra.mxu0 %v305
    %315 = vmatmul.bf16.gmra.mxu0 %v104
    %v316 = vpop.f32.mrf.mxu0
    %v317 = vadd.f32 %v100, %v316
    %v318 = vpop.f32.mrf.mxu0
    %319 = vdwg.mxu0
    %v321 = vsel %vm102, %v317, 0
    %323 = vmatpush.msra.mxu0 0.0
    %324 = vmatpush.msra.mxu0 0.0
    %325 = vmatpush.msra.mxu0 0.0
    %326 = vmatpush.msra.mxu0 0.0
    %327 = vmatpush.msra.mxu0 0.0
    %328 = vmatpush.msra.mxu0 0.0
    %329 = vmatpush.msra.mxu0 0.0
    %330 = vmatpush.msra.mxu0 0.0
    %331 = vmatpush.msra.mxu0 0.0
    %332 = vmatpush.msra.mxu0 0.0
    %333 = vmatpush.msra.mxu0 0.0
    %334 = vmatpush.msra.mxu0 0.0
    %335 = vmatpush.msra.mxu0 0.0
    %336 = vmatpush.msra.mxu0 0.0
    %337 = vmatpush.msra.mxu0 0.0
    %338 = vmatpush.msra.mxu0 %v94
    %339 = vmatmul.f32.gmra.mxu0 %v321
    %v340 = vpop.f32.mrf.mxu0
    %v341 = vadd.f32 0.0, %v340
    %342 = vdwg.mxu0
    %343 = vset.pattern.permute.xlu0 3
    %344 = vperm.xlu0 %343, %v92
    %v345 = vpop.permute.xlu0 %344
    %347 = vset.pattern.permute.xlu0 3
    %348 = vperm.xlu0 %347, %v93
    %v349 = vpop.permute.xlu0 %348
    %v351 = vperm.slane %v341, 0
    %v352 = vmul.f32 %v345, %v351
    %v353 = vmul.f32 %v349, %v351
    %v354 = vadd.f32 %v290, %v352
    %v355 = vadd.f32 %v291, %v353
    %v356 = vperm.slane %v341, 1
    %v357 = vmul.f32 %v345, %v356
    %v358 = vmul.f32 %v349, %v356
    %v359 = vadd.f32 %v295, %v357
    %v360 = vadd.f32 %v296, %v358
    %v361 = vperm.slane %v341, 2
    %v362 = vmul.f32 %v345, %v361
    %v363 = vmul.f32 %v349, %v361
    %v364 = vadd.f32 %v300, %v362
    %v365 = vadd.f32 %v301, %v363
    %366 = vrot.lane.b32.xlu0 %v173, 96
    %v367 = vpop.permute.xlu0 %366
    %v369 = vsel %vm106, %v367, 0
    %371 = vmatpush.bf16.msra.mxu0 0
    %372 = vmatpush.bf16.msra.mxu0 0
    %373 = vmatpush.bf16.msra.mxu0 0
    %374 = vmatpush.bf16.msra.mxu0 0
    %375 = vmatpush.bf16.msra.mxu0 0
    %376 = vmatpush.bf16.msra.mxu0 0
    %377 = vmatpush.bf16.msra.mxu0 0
    %378 = vmatpush.bf16.msra.mxu0 %v369
    %379 = vmatmul.bf16.gmra.mxu0 %v104
    %v380 = vpop.f32.mrf.mxu0
    %v381 = vadd.f32 %v100, %v380
    %v382 = vpop.f32.mrf.mxu0
    %383 = vdwg.mxu0
    %v385 = vsel %vm102, %v381, 0
    %387 = vmatpush.msra.mxu0 0.0
    %388 = vmatpush.msra.mxu0 0.0
    %389 = vmatpush.msra.mxu0 0.0
    %390 = vmatpush.msra.mxu0 0.0
    %391 = vmatpush.msra.mxu0 0.0
    %392 = vmatpush.msra.mxu0 0.0
    %393 = vmatpush.msra.mxu0 0.0
    %394 = vmatpush.msra.mxu0 0.0
    %395 = vmatpush.msra.mxu0 0.0
    %396 = vmatpush.msra.mxu0 0.0
    %397 = vmatpush.msra.mxu0 0.0
    %398 = vmatpush.msra.mxu0 0.0
    %399 = vmatpush.msra.mxu0 0.0
    %400 = vmatpush.msra.mxu0 0.0
    %401 = vmatpush.msra.mxu0 0.0
    %402 = vmatpush.msra.mxu0 %v94
    %403 = vmatmul.f32.gmra.mxu0 %v385
    %v404 = vpop.f32.mrf.mxu0
    %v405 = vadd.f32 0.0, %v404
    %406 = vdwg.mxu0
    %407 = vset.pattern.permute.xlu0 4
    %408 = vperm.xlu0 %407, %v92
    %v409 = vpop.permute.xlu0 %408
    %411 = vset.pattern.permute.xlu0 4
    %412 = vperm.xlu0 %411, %v93
    %v413 = vpop.permute.xlu0 %412
    %v415 = vperm.slane %v405, 0
    %v416 = vmul.f32 %v409, %v415
    %v417 = vmul.f32 %v413, %v415
    %v418 = vadd.f32 %v354, %v416
    %v419 = vadd.f32 %v355, %v417
    %v420 = vperm.slane %v405, 1
    %v421 = vmul.f32 %v409, %v420
    %v422 = vmul.f32 %v413, %v420
    %v423 = vadd.f32 %v359, %v421
    %v424 = vadd.f32 %v360, %v422
    %v425 = vperm.slane %v405, 2
    %v426 = vmul.f32 %v409, %v425
    %v427 = vmul.f32 %v413, %v425
    %v428 = vadd.f32 %v364, %v426
    %v429 = vadd.f32 %v365, %v427
    %430 = vrot.lane.b32.xlu0 %v173, 88
    %v431 = vpop.permute.xlu0 %430
    %v433 = vsel %vm106, %v431, 0
    %435 = vmatpush.bf16.msra.mxu0 0
    %436 = vmatpush.bf16.msra.mxu0 0
    %437 = vmatpush.bf16.msra.mxu0 0
    %438 = vmatpush.bf16.msra.mxu0 0
    %439 = vmatpush.bf16.msra.mxu0 0
    %440 = vmatpush.bf16.msra.mxu0 0
    %441 = vmatpush.bf16.msra.mxu0 0
    %442 = vmatpush.bf16.msra.mxu0 %v433
    %443 = vmatmul.bf16.gmra.mxu0 %v104
    %v444 = vpop.f32.mrf.mxu0
    %v445 = vadd.f32 %v100, %v444
    %v446 = vpop.f32.mrf.mxu0
    %447 = vdwg.mxu0
    %v449 = vsel %vm102, %v445, 0
    %451 = vmatpush.msra.mxu0 0.0
    %452 = vmatpush.msra.mxu0 0.0
    %453 = vmatpush.msra.mxu0 0.0
    %454 = vmatpush.msra.mxu0 0.0
    %455 = vmatpush.msra.mxu0 0.0
    %456 = vmatpush.msra.mxu0 0.0
    %457 = vmatpush.msra.mxu0 0.0
    %458 = vmatpush.msra.mxu0 0.0
    %459 = vmatpush.msra.mxu0 0.0
    %460 = vmatpush.msra.mxu0 0.0
    %461 = vmatpush.msra.mxu0 0.0
    %462 = vmatpush.msra.mxu0 0.0
    %463 = vmatpush.msra.mxu0 0.0
    %464 = vmatpush.msra.mxu0 0.0
    %465 = vmatpush.msra.mxu0 0.0
    %466 = vmatpush.msra.mxu0 %v94
    %467 = vmatmul.f32.gmra.mxu0 %v449
    %v468 = vpop.f32.mrf.mxu0
    %v469 = vadd.f32 0.0, %v468
    %470 = vdwg.mxu0
    %471 = vset.pattern.permute.xlu0 5
    %472 = vperm.xlu0 %471, %v92
    %v473 = vpop.permute.xlu0 %472
    %475 = vset.pattern.permute.xlu0 5
    %476 = vperm.xlu0 %475, %v93
    %v477 = vpop.permute.xlu0 %476
    %v479 = vperm.slane %v469, 0
    %v480 = vmul.f32 %v473, %v479
    %v481 = vmul.f32 %v477, %v479
    %v482 = vadd.f32 %v418, %v480
    %v483 = vadd.f32 %v419, %v481
    %v484 = vperm.slane %v469, 1
    %v485 = vmul.f32 %v473, %v484
    %v486 = vmul.f32 %v477, %v484
    %v487 = vadd.f32 %v423, %v485
    %v488 = vadd.f32 %v424, %v486
    %v489 = vperm.slane %v469, 2
    %v490 = vmul.f32 %v473, %v489
    %v491 = vmul.f32 %v477, %v489
    %v492 = vadd.f32 %v428, %v490
    %v493 = vadd.f32 %v429, %v491
    %494 = vrot.lane.b32.xlu0 %v173, 80
    %v495 = vpop.permute.xlu0 %494
    %v497 = vsel %vm106, %v495, 0
    %499 = vmatpush.bf16.msra.mxu0 0
    %500 = vmatpush.bf16.msra.mxu0 0
    %501 = vmatpush.bf16.msra.mxu0 0
    %502 = vmatpush.bf16.msra.mxu0 0
    %503 = vmatpush.bf16.msra.mxu0 0
    %504 = vmatpush.bf16.msra.mxu0 0
    %505 = vmatpush.bf16.msra.mxu0 0
    %506 = vmatpush.bf16.msra.mxu0 %v497
    %507 = vmatmul.bf16.gmra.mxu0 %v104
    %v508 = vpop.f32.mrf.mxu0
    %v509 = vadd.f32 %v100, %v508
    %v510 = vpop.f32.mrf.mxu0
    %511 = vdwg.mxu0
    %v513 = vsel %vm102, %v509, 0
    %515 = vmatpush.msra.mxu0 0.0
    %516 = vmatpush.msra.mxu0 0.0
    %517 = vmatpush.msra.mxu0 0.0
    %518 = vmatpush.msra.mxu0 0.0
    %519 = vmatpush.msra.mxu0 0.0
    %520 = vmatpush.msra.mxu0 0.0
    %521 = vmatpush.msra.mxu0 0.0
    %522 = vmatpush.msra.mxu0 0.0
    %523 = vmatpush.msra.mxu0 0.0
    %524 = vmatpush.msra.mxu0 0.0
    %525 = vmatpush.msra.mxu0 0.0
    %526 = vmatpush.msra.mxu0 0.0
    %527 = vmatpush.msra.mxu0 0.0
    %528 = vmatpush.msra.mxu0 0.0
    %529 = vmatpush.msra.mxu0 0.0
    %530 = vmatpush.msra.mxu0 %v94
    %531 = vmatmul.f32.gmra.mxu0 %v513
    %v532 = vpop.f32.mrf.mxu0
    %v533 = vadd.f32 0.0, %v532
    %534 = vdwg.mxu0
    %535 = vset.pattern.permute.xlu0 6
    %536 = vperm.xlu0 %535, %v92
    %v537 = vpop.permute.xlu0 %536
    %539 = vset.pattern.permute.xlu0 6
    %540 = vperm.xlu0 %539, %v93
    %v541 = vpop.permute.xlu0 %540
    %v543 = vperm.slane %v533, 0
    %v544 = vmul.f32 %v537, %v543
    %v545 = vmul.f32 %v541, %v543
    %v546 = vadd.f32 %v482, %v544
    %v547 = vadd.f32 %v483, %v545
    %v548 = vperm.slane %v533, 1
    %v549 = vmul.f32 %v537, %v548
    %v550 = vmul.f32 %v541, %v548
    %v551 = vadd.f32 %v487, %v549
    %v552 = vadd.f32 %v488, %v550
    %v553 = vperm.slane %v533, 2
    %v554 = vmul.f32 %v537, %v553
    %v555 = vmul.f32 %v541, %v553
    %v556 = vadd.f32 %v492, %v554
    %v557 = vadd.f32 %v493, %v555
    %558 = vrot.lane.b32.xlu0 %v173, 72
    %v559 = vpop.permute.xlu0 %558
    %v561 = vsel %vm106, %v559, 0
    %563 = vmatpush.bf16.msra.mxu0 0
    %564 = vmatpush.bf16.msra.mxu0 0
    %565 = vmatpush.bf16.msra.mxu0 0
    %566 = vmatpush.bf16.msra.mxu0 0
    %567 = vmatpush.bf16.msra.mxu0 0
    %568 = vmatpush.bf16.msra.mxu0 0
    %569 = vmatpush.bf16.msra.mxu0 0
    %570 = vmatpush.bf16.msra.mxu0 %v561
    %571 = vmatmul.bf16.gmra.mxu0 %v104
    %v572 = vpop.f32.mrf.mxu0
    %v573 = vadd.f32 %v100, %v572
    %v574 = vpop.f32.mrf.mxu0
    %575 = vdwg.mxu0
    %v577 = vsel %vm102, %v573, 0
    %579 = vmatpush.msra.mxu0 0.0
    %580 = vmatpush.msra.mxu0 0.0
    %581 = vmatpush.msra.mxu0 0.0
    %582 = vmatpush.msra.mxu0 0.0
    %583 = vmatpush.msra.mxu0 0.0
    %584 = vmatpush.msra.mxu0 0.0
    %585 = vmatpush.msra.mxu0 0.0
    %586 = vmatpush.msra.mxu0 0.0
    %587 = vmatpush.msra.mxu0 0.0
    %588 = vmatpush.msra.mxu0 0.0
    %589 = vmatpush.msra.mxu0 0.0
    %590 = vmatpush.msra.mxu0 0.0
    %591 = vmatpush.msra.mxu0 0.0
    %592 = vmatpush.msra.mxu0 0.0
    %593 = vmatpush.msra.mxu0 0.0
    %594 = vmatpush.msra.mxu0 %v94
    %595 = vmatmul.f32.gmra.mxu0 %v577
    %v596 = vpop.f32.mrf.mxu0
    %v597 = vadd.f32 0.0, %v596
    %598 = vdwg.mxu0
    %599 = vset.pattern.permute.xlu0 7
    %600 = vperm.xlu0 %599, %v92
    %v601 = vpop.permute.xlu0 %600
    %603 = vset.pattern.permute.xlu0 7
    %604 = vperm.xlu0 %603, %v93
    %v605 = vpop.permute.xlu0 %604
    %v607 = vperm.slane %v597, 0
    %v608 = vmul.f32 %v601, %v607
    %v609 = vmul.f32 %v605, %v607
    %v610 = vadd.f32 %v546, %v608
    %v611 = vadd.f32 %v547, %v609
    %v612 = vperm.slane %v597, 1
    %v613 = vmul.f32 %v601, %v612
    %v614 = vmul.f32 %v605, %v612
    %v615 = vadd.f32 %v551, %v613
    %v616 = vadd.f32 %v552, %v614
    %v617 = vperm.slane %v597, 2
    %v618 = vmul.f32 %v601, %v617
    %v619 = vmul.f32 %v605, %v617
    %v620 = vadd.f32 %v556, %v618
    %v621 = vadd.f32 %v557, %v619
    %vm622 = vcmask 130048
    %623 = vst.msk [vmem:[#allocation5] sm:$0xff] %vm622, %v610
    %624 = vst.msk [vmem:[#allocation5 + $0x8] sm:$0xff] %vm622, %v611
    %s625 = scalar_lea.vmem [#allocation5], 16
    %626 = vst.msk [vmem:[%s625] sm:$0xff] %vm622, %v615
    %627 = vst.msk [vmem:[%s625 + $0x8] sm:$0xff] %vm622, %v616
    %s628 = scalar_lea.vmem [#allocation5], 32
    %629 = vst.msk [vmem:[%s628] sm:$0xff] %vm622, %v620
    %630 = vst.msk [vmem:[%s628 + $0x8] sm:$0xff] %vm622, %v621
    %631 = vrot.lane.b32.xlu0 %v173, 64
    %v632 = vpop.permute.xlu0 %631
    %v634 = vsel %vm106, %v632, 0
    %636 = vmatpush.bf16.msra.mxu0 0
    %637 = vmatpush.bf16.msra.mxu0 0
    %638 = vmatpush.bf16.msra.mxu0 0
    %639 = vmatpush.bf16.msra.mxu0 0
    %640 = vmatpush.bf16.msra.mxu0 0
    %641 = vmatpush.bf16.msra.mxu0 0
    %642 = vmatpush.bf16.msra.mxu0 0
    %643 = vmatpush.bf16.msra.mxu0 %v634
    %644 = vmatmul.bf16.gmra.mxu0 %v104
    %v645 = vpop.f32.mrf.mxu0
    %v646 = vadd.f32 %v100, %v645
    %v647 = vpop.f32.mrf.mxu0
    %648 = vdwg.mxu0
    %v650 = vsel %vm102, %v646, 0
    %652 = vmatpush.msra.mxu0 0.0
    %653 = vmatpush.msra.mxu0 0.0
    %654 = vmatpush.msra.mxu0 0.0
    %655 = vmatpush.msra.mxu0 0.0
    %656 = vmatpush.msra.mxu0 0.0
    %657 = vmatpush.msra.mxu0 0.0
    %658 = vmatpush.msra.mxu0 0.0
    %659 = vmatpush.msra.mxu0 0.0
    %660 = vmatpush.msra.mxu0 0.0
    %661 = vmatpush.msra.mxu0 0.0
    %662 = vmatpush.msra.mxu0 0.0
    %663 = vmatpush.msra.mxu0 0.0
    %664 = vmatpush.msra.mxu0 0.0
    %665 = vmatpush.msra.mxu0 0.0
    %666 = vmatpush.msra.mxu0 0.0
    %667 = vmatpush.msra.mxu0 %v94
    %668 = vmatmul.f32.gmra.mxu0 %v650
    %v669 = vpop.f32.mrf.mxu0
    %v670 = vadd.f32 0.0, %v669
    %671 = vdwg.mxu0
    %v672 = vperm.slane %v670, 0
    %v673 = vmul.f32 %v149, %v672
    %v674 = vmul.f32 %v154, %v672
    %v675 = vadd.f32 %v673, 0.0
    %v676 = vadd.f32 %v674, 0.0
    %v677 = vperm.slane %v670, 1
    %v678 = vmul.f32 %v149, %v677
    %v679 = vmul.f32 %v154, %v677
    %v680 = vadd.f32 %v678, 0.0
    %v681 = vadd.f32 %v679, 0.0
    %v682 = vperm.slane %v670, 2
    %v683 = vmul.f32 %v149, %v682
    %v684 = vmul.f32 %v154, %v682
    %v685 = vadd.f32 %v683, 0.0
    %v686 = vadd.f32 %v684, 0.0
    %687 = vrot.lane.b32.xlu0 %v173, 56
    %v688 = vpop.permute.xlu0 %687
    %v690 = vsel %vm106, %v688, 0
    %692 = vmatpush.bf16.msra.mxu0 0
    %693 = vmatpush.bf16.msra.mxu0 0
    %694 = vmatpush.bf16.msra.mxu0 0
    %695 = vmatpush.bf16.msra.mxu0 0
    %696 = vmatpush.bf16.msra.mxu0 0
    %697 = vmatpush.bf16.msra.mxu0 0
    %698 = vmatpush.bf16.msra.mxu0 0
    %699 = vmatpush.bf16.msra.mxu0 %v690
    %700 = vmatmul.bf16.gmra.mxu0 %v104
    %v701 = vpop.f32.mrf.mxu0
    %v702 = vadd.f32 %v100, %v701
    %v703 = vpop.f32.mrf.mxu0
    %704 = vdwg.mxu0
    %v706 = vsel %vm102, %v702, 0
    %708 = vmatpush.msra.mxu0 0.0
    %709 = vmatpush.msra.mxu0 0.0
    %710 = vmatpush.msra.mxu0 0.0
    %711 = vmatpush.msra.mxu0 0.0
    %712 = vmatpush.msra.mxu0 0.0
    %713 = vmatpush.msra.mxu0 0.0
    %714 = vmatpush.msra.mxu0 0.0
    %715 = vmatpush.msra.mxu0 0.0
    %716 = vmatpush.msra.mxu0 0.0
    %717 = vmatpush.msra.mxu0 0.0
    %718 = vmatpush.msra.mxu0 0.0
    %719 = vmatpush.msra.mxu0 0.0
    %720 = vmatpush.msra.mxu0 0.0
    %721 = vmatpush.msra.mxu0 0.0
    %722 = vmatpush.msra.mxu0 0.0
    %723 = vmatpush.msra.mxu0 %v94
    %724 = vmatmul.f32.gmra.mxu0 %v706
    %v725 = vpop.f32.mrf.mxu0
    %v726 = vadd.f32 0.0, %v725
    %727 = vdwg.mxu0
    %v728 = vperm.slane %v726, 0
    %v729 = vmul.f32 %v217, %v728
    %v730 = vmul.f32 %v221, %v728
    %v731 = vadd.f32 %v675, %v729
    %v732 = vadd.f32 %v676, %v730
    %v733 = vperm.slane %v726, 1
    %v734 = vmul.f32 %v217, %v733
    %v735 = vmul.f32 %v221, %v733
    %v736 = vadd.f32 %v680, %v734
    %v737 = vadd.f32 %v681, %v735
    %v738 = vperm.slane %v726, 2
    %v739 = vmul.f32 %v217, %v738
    %v740 = vmul.f32 %v221, %v738
    %v741 = vadd.f32 %v685, %v739
    %v742 = vadd.f32 %v686, %v740
    %743 = vrot.lane.b32.xlu0 %v173, 48
    %v744 = vpop.permute.xlu0 %743
    %v746 = vsel %vm106, %v744, 0
    %748 = vmatpush.bf16.msra.mxu0 0
    %749 = vmatpush.bf16.msra.mxu0 0
    %750 = vmatpush.bf16.msra.mxu0 0
    %751 = vmatpush.bf16.msra.mxu0 0
    %752 = vmatpush.bf16.msra.mxu0 0
    %753 = vmatpush.bf16.msra.mxu0 0
    %754 = vmatpush.bf16.msra.mxu0 0
    %755 = vmatpush.bf16.msra.mxu0 %v746
    %756 = vmatmul.bf16.gmra.mxu0 %v104
    %v757 = vpop.f32.mrf.mxu0
    %v758 = vadd.f32 %v100, %v757
    %v759 = vpop.f32.mrf.mxu0
    %760 = vdwg.mxu0
    %v762 = vsel %vm102, %v758, 0
    %764 = vmatpush.msra.mxu0 0.0
    %765 = vmatpush.msra.mxu0 0.0
    %766 = vmatpush.msra.mxu0 0.0
    %767 = vmatpush.msra.mxu0 0.0
    %768 = vmatpush.msra.mxu0 0.0
    %769 = vmatpush.msra.mxu0 0.0
    %770 = vmatpush.msra.mxu0 0.0
    %771 = vmatpush.msra.mxu0 0.0
    %772 = vmatpush.msra.mxu0 0.0
    %773 = vmatpush.msra.mxu0 0.0
    %774 = vmatpush.msra.mxu0 0.0
    %775 = vmatpush.msra.mxu0 0.0
    %776 = vmatpush.msra.mxu0 0.0
    %777 = vmatpush.msra.mxu0 0.0
    %778 = vmatpush.msra.mxu0 0.0
    %779 = vmatpush.msra.mxu0 %v94
    %780 = vmatmul.f32.gmra.mxu0 %v762
    %v781 = vpop.f32.mrf.mxu0
    %v782 = vadd.f32 0.0, %v781
    %783 = vdwg.mxu0
    %v784 = vperm.slane %v782, 0
    %v785 = vmul.f32 %v281, %v784
    %v786 = vmul.f32 %v285, %v784
    %v787 = vadd.f32 %v731, %v785
    %v788 = vadd.f32 %v732, %v786
    %v789 = vperm.slane %v782, 1
    %v790 = vmul.f32 %v281, %v789
    %v791 = vmul.f32 %v285, %v789
    %v792 = vadd.f32 %v736, %v790
    %v793 = vadd.f32 %v737, %v791
    %v794 = vperm.slane %v782, 2
    %v795 = vmul.f32 %v281, %v794
    %v796 = vmul.f32 %v285, %v794
    %v797 = vadd.f32 %v741, %v795
    %v798 = vadd.f32 %v742, %v796
    %799 = vrot.lane.b32.xlu0 %v173, 40
    %v800 = vpop.permute.xlu0 %799
    %v802 = vsel %vm106, %v800, 0
    %804 = vmatpush.bf16.msra.mxu0 0
    %805 = vmatpush.bf16.msra.mxu0 0
    %806 = vmatpush.bf16.msra.mxu0 0
    %807 = vmatpush.bf16.msra.mxu0 0
    %808 = vmatpush.bf16.msra.mxu0 0
    %809 = vmatpush.bf16.msra.mxu0 0
    %810 = vmatpush.bf16.msra.mxu0 0
    %811 = vmatpush.bf16.msra.mxu0 %v802
    %812 = vmatmul.bf16.gmra.mxu0 %v104
    %v813 = vpop.f32.mrf.mxu0
    %v814 = vadd.f32 %v100, %v813
    %v815 = vpop.f32.mrf.mxu0
    %816 = vdwg.mxu0
    %v818 = vsel %vm102, %v814, 0
    %820 = vmatpush.msra.mxu0 0.0
    %821 = vmatpush.msra.mxu0 0.0
    %822 = vmatpush.msra.mxu0 0.0
    %823 = vmatpush.msra.mxu0 0.0
    %824 = vmatpush.msra.mxu0 0.0
    %825 = vmatpush.msra.mxu0 0.0
    %826 = vmatpush.msra.mxu0 0.0
    %827 = vmatpush.msra.mxu0 0.0
    %828 = vmatpush.msra.mxu0 0.0
    %829 = vmatpush.msra.mxu0 0.0
    %830 = vmatpush.msra.mxu0 0.0
    %831 = vmatpush.msra.mxu0 0.0
    %832 = vmatpush.msra.mxu0 0.0
    %833 = vmatpush.msra.mxu0 0.0
    %834 = vmatpush.msra.mxu0 0.0
    %835 = vmatpush.msra.mxu0 %v94
    %836 = vmatmul.f32.gmra.mxu0 %v818
    %v837 = vpop.f32.mrf.mxu0
    %v838 = vadd.f32 0.0, %v837
    %839 = vdwg.mxu0
    %v840 = vperm.slane %v838, 0
    %v841 = vmul.f32 %v345, %v840
    %v842 = vmul.f32 %v349, %v840
    %v843 = vadd.f32 %v787, %v841
    %v844 = vadd.f32 %v788, %v842
    %v845 = vperm.slane %v838, 1
    %v846 = vmul.f32 %v345, %v845
    %v847 = vmul.f32 %v349, %v845
    %v848 = vadd.f32 %v792, %v846
    %v849 = vadd.f32 %v793, %v847
    %v850 = vperm.slane %v838, 2
    %v851 = vmul.f32 %v345, %v850
    %v852 = vmul.f32 %v349, %v850
    %v853 = vadd.f32 %v797, %v851
    %v854 = vadd.f32 %v798, %v852
    %855 = vrot.lane.b32.xlu0 %v173, 32
    %v856 = vpop.permute.xlu0 %855
    %v858 = vsel %vm106, %v856, 0
    %860 = vmatpush.bf16.msra.mxu0 0
    %861 = vmatpush.bf16.msra.mxu0 0
    %862 = vmatpush.bf16.msra.mxu0 0
    %863 = vmatpush.bf16.msra.mxu0 0
    %864 = vmatpush.bf16.msra.mxu0 0
    %865 = vmatpush.bf16.msra.mxu0 0
    %866 = vmatpush.bf16.msra.mxu0 0
    %867 = vmatpush.bf16.msra.mxu0 %v858
    %868 = vmatmul.bf16.gmra.mxu0 %v104
    %v869 = vpop.f32.mrf.mxu0
    %v870 = vadd.f32 %v100, %v869
    %v871 = vpop.f32.mrf.mxu0
    %872 = vdwg.mxu0
    %v874 = vsel %vm102, %v870, 0
    %876 = vmatpush.msra.mxu0 0.0
    %877 = vmatpush.msra.mxu0 0.0
    %878 = vmatpush.msra.mxu0 0.0
    %879 = vmatpush.msra.mxu0 0.0
    %880 = vmatpush.msra.mxu0 0.0
    %881 = vmatpush.msra.mxu0 0.0
    %882 = vmatpush.msra.mxu0 0.0
    %883 = vmatpush.msra.mxu0 0.0
    %884 = vmatpush.msra.mxu0 0.0
    %885 = vmatpush.msra.mxu0 0.0
    %886 = vmatpush.msra.mxu0 0.0
    %887 = vmatpush.msra.mxu0 0.0
    %888 = vmatpush.msra.mxu0 0.0
    %889 = vmatpush.msra.mxu0 0.0
    %890 = vmatpush.msra.mxu0 0.0
    %891 = vmatpush.msra.mxu0 %v94
    %892 = vmatmul.f32.gmra.mxu0 %v874
    %v893 = vpop.f32.mrf.mxu0
    %v894 = vadd.f32 0.0, %v893
    %895 = vdwg.mxu0
    %v896 = vperm.slane %v894, 0
    %v897 = vmul.f32 %v409, %v896
    %v898 = vmul.f32 %v413, %v896
    %v899 = vadd.f32 %v843, %v897
    %v900 = vadd.f32 %v844, %v898
    %v901 = vperm.slane %v894, 1
    %v902 = vmul.f32 %v409, %v901
    %v903 = vmul.f32 %v413, %v901
    %v904 = vadd.f32 %v848, %v902
    %v905 = vadd.f32 %v849, %v903
    %v906 = vperm.slane %v894, 2
    %v907 = vmul.f32 %v409, %v906
    %v908 = vmul.f32 %v413, %v906
    %v909 = vadd.f32 %v853, %v907
    %v910 = vadd.f32 %v854, %v908
    %911 = vrot.lane.b32.xlu0 %v173, 24
    %v912 = vpop.permute.xlu0 %911
    %v914 = vsel %vm106, %v912, 0
    %916 = vmatpush.bf16.msra.mxu0 0
    %917 = vmatpush.bf16.msra.mxu0 0
    %918 = vmatpush.bf16.msra.mxu0 0
    %919 = vmatpush.bf16.msra.mxu0 0
    %920 = vmatpush.bf16.msra.mxu0 0
    %921 = vmatpush.bf16.msra.mxu0 0
    %922 = vmatpush.bf16.msra.mxu0 0
    %923 = vmatpush.bf16.msra.mxu0 %v914
    %924 = vmatmul.bf16.gmra.mxu0 %v104
    %v925 = vpop.f32.mrf.mxu0
    %v926 = vadd.f32 %v100, %v925
    %v927 = vpop.f32.mrf.mxu0
    %928 = vdwg.mxu0
    %v930 = vsel %vm102, %v926, 0
    %932 = vmatpush.msra.mxu0 0.0
    %933 = vmatpush.msra.mxu0 0.0
    %934 = vmatpush.msra.mxu0 0.0
    %935 = vmatpush.msra.mxu0 0.0
    %936 = vmatpush.msra.mxu0 0.0
    %937 = vmatpush.msra.mxu0 0.0
    %938 = vmatpush.msra.mxu0 0.0
    %939 = vmatpush.msra.mxu0 0.0
    %940 = vmatpush.msra.mxu0 0.0
    %941 = vmatpush.msra.mxu0 0.0
    %942 = vmatpush.msra.mxu0 0.0
    %943 = vmatpush.msra.mxu0 0.0
    %944 = vmatpush.msra.mxu0 0.0
    %945 = vmatpush.msra.mxu0 0.0
    %946 = vmatpush.msra.mxu0 0.0
    %947 = vmatpush.msra.mxu0 %v94
    %948 = vmatmul.f32.gmra.mxu0 %v930
    %v949 = vpop.f32.mrf.mxu0
    %v950 = vadd.f32 0.0, %v949
    %951 = vdwg.mxu0
    %v952 = vperm.slane %v950, 0
    %v953 = vmul.f32 %v473, %v952
    %v954 = vmul.f32 %v477, %v952
    %v955 = vadd.f32 %v899, %v953
    %v956 = vadd.f32 %v900, %v954
    %v957 = vperm.slane %v950, 1
    %v958 = vmul.f32 %v473, %v957
    %v959 = vmul.f32 %v477, %v957
    %v960 = vadd.f32 %v904, %v958
    %v961 = vadd.f32 %v905, %v959
    %v962 = vperm.slane %v950, 2
    %v963 = vmul.f32 %v473, %v962
    %v964 = vmul.f32 %v477, %v962
    %v965 = vadd.f32 %v909, %v963
    %v966 = vadd.f32 %v910, %v964
    %967 = vrot.lane.b32.xlu0 %v173, 16
    %v968 = vpop.permute.xlu0 %967
    %v970 = vsel %vm106, %v968, 0
    %972 = vmatpush.bf16.msra.mxu0 0
    %973 = vmatpush.bf16.msra.mxu0 0
    %974 = vmatpush.bf16.msra.mxu0 0
    %975 = vmatpush.bf16.msra.mxu0 0
    %976 = vmatpush.bf16.msra.mxu0 0
    %977 = vmatpush.bf16.msra.mxu0 0
    %978 = vmatpush.bf16.msra.mxu0 0
    %979 = vmatpush.bf16.msra.mxu0 %v970
    %980 = vmatmul.bf16.gmra.mxu0 %v104
    %v981 = vpop.f32.mrf.mxu0
    %v982 = vadd.f32 %v100, %v981
    %v983 = vpop.f32.mrf.mxu0
    %984 = vdwg.mxu0
    %v986 = vsel %vm102, %v982, 0
    %988 = vmatpush.msra.mxu0 0.0
    %989 = vmatpush.msra.mxu0 0.0
    %990 = vmatpush.msra.mxu0 0.0
    %991 = vmatpush.msra.mxu0 0.0
    %992 = vmatpush.msra.mxu0 0.0
    %993 = vmatpush.msra.mxu0 0.0
    %994 = vmatpush.msra.mxu0 0.0
    %995 = vmatpush.msra.mxu0 0.0
    %996 = vmatpush.msra.mxu0 0.0
    %997 = vmatpush.msra.mxu0 0.0
    %998 = vmatpush.msra.mxu0 0.0
    %999 = vmatpush.msra.mxu0 0.0
    %1000 = vmatpush.msra.mxu0 0.0
    %1001 = vmatpush.msra.mxu0 0.0
    %1002 = vmatpush.msra.mxu0 0.0
    %1003 = vmatpush.msra.mxu0 %v94
    %1004 = vmatmul.f32.gmra.mxu0 %v986
    %v1005 = vpop.f32.mrf.mxu0
    %v1006 = vadd.f32 0.0, %v1005
    %1007 = vdwg.mxu0
    %v1008 = vperm.slane %v1006, 0
    %v1009 = vmul.f32 %v537, %v1008
    %v1010 = vmul.f32 %v541, %v1008
    %v1011 = vadd.f32 %v955, %v1009
    %v1012 = vadd.f32 %v956, %v1010
    %v1013 = vperm.slane %v1006, 1
    %v1014 = vmul.f32 %v537, %v1013
    %v1015 = vmul.f32 %v541, %v1013
    %v1016 = vadd.f32 %v960, %v1014
    %v1017 = vadd.f32 %v961, %v1015
    %v1018 = vperm.slane %v1006, 2
    %v1019 = vmul.f32 %v537, %v1018
    %v1020 = vmul.f32 %v541, %v1018
    %v1021 = vadd.f32 %v965, %v1019
    %v1022 = vadd.f32 %v966, %v1020
    %1023 = vrot.lane.b32.xlu0 %v173, 8
    %v1024 = vpop.permute.xlu0 %1023
    %v1026 = vsel %vm106, %v1024, 0
    %1028 = vmatpush.bf16.msra.mxu0 0
    %1029 = vmatpush.bf16.msra.mxu0 0
    %1030 = vmatpush.bf16.msra.mxu0 0
    %1031 = vmatpush.bf16.msra.mxu0 0
    %1032 = vmatpush.bf16.msra.mxu0 0
    %1033 = vmatpush.bf16.msra.mxu0 0
    %1034 = vmatpush.bf16.msra.mxu0 0
    %1035 = vmatpush.bf16.msra.mxu0 %v1026
    %1036 = vmatmul.bf16.gmra.mxu0 %v104
    %v1037 = vpop.f32.mrf.mxu0
    %v1038 = vadd.f32 %v100, %v1037
    %v1039 = vpop.f32.mrf.mxu0
    %1040 = vdwg.mxu0
    %v1042 = vsel %vm102, %v1038, 0
    %1044 = vmatpush.msra.mxu0 0.0
    %1045 = vmatpush.msra.mxu0 0.0
    %1046 = vmatpush.msra.mxu0 0.0
    %1047 = vmatpush.msra.mxu0 0.0
    %1048 = vmatpush.msra.mxu0 0.0
    %1049 = vmatpush.msra.mxu0 0.0
    %1050 = vmatpush.msra.mxu0 0.0
    %1051 = vmatpush.msra.mxu0 0.0
    %1052 = vmatpush.msra.mxu0 0.0
    %1053 = vmatpush.msra.mxu0 0.0
    %1054 = vmatpush.msra.mxu0 0.0
    %1055 = vmatpush.msra.mxu0 0.0
    %1056 = vmatpush.msra.mxu0 0.0
    %1057 = vmatpush.msra.mxu0 0.0
    %1058 = vmatpush.msra.mxu0 0.0
    %1059 = vmatpush.msra.mxu0 %v94
    %1060 = vmatmul.f32.gmra.mxu0 %v1042
    %v1061 = vpop.f32.mrf.mxu0
    %v1062 = vadd.f32 0.0, %v1061
    %1063 = vdwg.mxu0
    %v1064 = vperm.slane %v1062, 0
    %v1065 = vmul.f32 %v601, %v1064
    %v1066 = vmul.f32 %v605, %v1064
    %v1067 = vadd.f32 %v1011, %v1065
    %v1068 = vadd.f32 %v1012, %v1066
    %v1069 = vperm.slane %v1062, 1
    %v1070 = vmul.f32 %v601, %v1069
    %v1071 = vmul.f32 %v605, %v1069
    %v1072 = vadd.f32 %v1016, %v1070
    %v1073 = vadd.f32 %v1017, %v1071
    %v1074 = vperm.slane %v1062, 2
    %v1075 = vmul.f32 %v601, %v1074
    %v1076 = vmul.f32 %v605, %v1074
    %v1077 = vadd.f32 %v1021, %v1075
    %v1078 = vadd.f32 %v1022, %v1076
    %s1079 = scalar_lea.vmem [#allocation5], 48
    %1080 = vst.msk [vmem:[%s1079] sm:$0xff] %vm622, %v1067
    %1081 = vst.msk [vmem:[%s1079 + $0x8] sm:$0xff] %vm622, %v1068
    %s1082 = scalar_lea.vmem [#allocation5], 64
    %1083 = vst.msk [vmem:[%s1082] sm:$0xff] %vm622, %v1072
    %1084 = vst.msk [vmem:[%s1082 + $0x8] sm:$0xff] %vm622, %v1073
    %s1085 = scalar_lea.vmem [#allocation5], 80
    %1086 = vst.msk [vmem:[%s1085] sm:$0xff] %vm622, %v1077
    %1087 = vst.msk [vmem:[%s1085 + $0x8] sm:$0xff] %vm622, %v1078
    // Predicated region
    $region34: #{tpu_custom_call.1} parent=1 // pred_check
      _
    $region35: #{tpu_custom_call.1} parent=1 // pred_check_branch
      %1089 = sbr.rel (0) target = $region37
    $region36: #{tpu_custom_call.1} parent=1 // pred_region
      %1091 = vsyncadd [#allocation4], 0
      %s1092 = sshll.u32 [#allocation5], 4
      %s1093 = int_to_ptr.vmem [resolvable:$true] %s1092
      %s1094 = sshll.u32 %s7, 4
      %s1095 = int_to_ptr.hbm [resolvable:$true] %s1094
      %1100 = dma.vmem_to_hbm [thread:$0]  %s1093, 1536, %s1095, [#allocation4], 128, 128, 8
    $region37: #{tpu_custom_call.1} parent=1 // pred_fallthru
      _
    // Predicated region
    $region38: #{tpu_custom_call.1} parent=1 // pred_check
      _
    $region39: #{tpu_custom_call.1} parent=1 // pred_check_branch
      %1102 = sbr.rel (0) target = $region41
    $region40: #{tpu_custom_call.1} parent=1 // pred_region
      %1104 = dma.done [#allocation4], 1536
    $region41: #{tpu_custom_call.1} parent=1 // pred_fallthru
      _
    %1105 = vsyncpa [#allocation3], 1
    %1106 = vsyncpa [#allocation4], 1

</llo_original>
